<compile_context>
chip_gen: v7x
topology: tpu7x:2x2x1
jax: 0.10.0
libtpu: 0.0.40
codegen_flags: <defaults>
</compile_context>

<pallas_src>
import functools

import jax
import jax.numpy as jnp
from jax.experimental import pallas as pl
from jax.experimental.pallas import tpu as pltpu

LN_EPS = 1e-5  # torch.nn.LayerNorm default


def _layernorm_relu(h):
    """LayerNorm (no affine) + ReLU, single-pass statistics, f32."""
    mu = jnp.mean(h, axis=-1, keepdims=True)
    ms = jnp.mean(h * h, axis=-1, keepdims=True)
    var = jnp.maximum(ms - mu * mu, 0.0)
    return jnp.maximum((h - mu) * jax.lax.rsqrt(var + LN_EPS), 0.0)


def encoder_kernel(x_ref, lbl_ref,
                   w0e_ref, w0c_ref, b0_ref,
                   w1_ref, b1_ref,
                   wh_ref, bh_ref,
                   out_ref, *, n_classes):
    x = x_ref[...]               # (TB, n_in)  bf16
    lbl = lbl_ref[...]           # (TB, 1)     int32

    # ---- Layer 0: CondLayers = expr_L(expr) + cond_L(one_hot(batch)) ----
    h = jnp.dot(x, w0e_ref[...], preferred_element_type=jnp.float32)
    h = h + b0_ref[...]          # (1, h0) bias, broadcast once per tile
    # cond_L(one_hot(label)) == row gather of W_cond; n_classes is tiny and
    # static, so realise it as an unrolled per-class select (VPU only).
    w0c = w0c_ref[...]           # (n_classes, h0) f32, VMEM-resident
    for c in range(n_classes):
        h = h + jnp.where(lbl == c, w0c[c:c + 1, :], 0.0)
    h = _layernorm_relu(h)

    # ---- Layer 1: plain Linear + LN + ReLU ----
    h = jnp.dot(h.astype(jnp.bfloat16), w1_ref[...],
                preferred_element_type=jnp.float32) + b1_ref[...]
    h = _layernorm_relu(h)

    # ---- Fused mean / log_var heads: one matmul, one output block ----
    out_ref[...] = (jnp.dot(h.astype(jnp.bfloat16), wh_ref[...],
                            preferred_element_type=jnp.float32) + bh_ref[...])


def encoder_forward(x, batch_labels, params, n_classes, *, tb=128):
    """x: (B, n_in) float32, batch_labels: (B,) int32 in [0, n_classes)."""
    B, _ = x.shape
    latent2 = params["wh"].shape[1]
    n_tiles = pl.cdiv(B, tb)
    Bp = n_tiles * tb

    xb = x.astype(jnp.bfloat16)                       # bf16 activation stream
    lbl = batch_labels.astype(jnp.int32).reshape(B, 1)
    if Bp != B:                                       # pad batch to tile grid
        xb = jnp.pad(xb, ((0, Bp - B), (0, 0)))
        lbl = jnp.pad(lbl, ((0, Bp - B), (0, 0)))

    def tiled(a):
        cols = a.shape[1]
        return pl.BlockSpec((tb, cols), lambda i: (i, 0))

    def resident(a):
        nd = a.ndim
        return pl.BlockSpec(a.shape, lambda i, _nd=nd: (0,) * _nd)

    operands = (xb, lbl,
                params["w0e"], params["w0c"], params["b0"],
                params["w1"], params["b1"],
                params["wh"], params["bh"])
    in_specs = [tiled(xb), tiled(lbl)] + [resident(a) for a in operands[2:]]

    out = pl.pallas_call(
        functools.partial(encoder_kernel, n_classes=n_classes),
        out_shape=jax.ShapeDtypeStruct((Bp, latent2), jnp.float32),
        grid=(n_tiles,),
        in_specs=in_specs,
        out_specs=pl.BlockSpec((tb, latent2), lambda i: (i, 0)),
        compiler_params=pltpu.CompilerParams(
            dimension_semantics=("parallel",),        # v7x: shard across 2 TCs
            vmem_limit_bytes=32 * 1024 * 1024),       # safe on v5e/v6e/v7x
    )(*operands)

    out = out[:B]
    latent = latent2 // 2
    return out[:, :latent], out[:, latent:]


def init_params(key, layer_sizes, latent_dim, n_classes):
    """Weights stored pre-transposed (in, out); MXU streams kept in bf16."""
    n_in, h0, h1 = layer_sizes
    keys = jax.random.split(key, 9)
    s = 0.1
    w0e = jax.random.normal(keys[0], (n_in, h0), jnp.float32) * s
    w0c = jax.random.normal(keys[1], (n_classes, h0), jnp.float32) * s
    b0 = jax.random.normal(keys[2], (1, h0), jnp.float32) * s
    w1 = jax.random.normal(keys[3], (h0, h1), jnp.float32) * s
    b1 = jax.random.normal(keys[4], (1, h1), jnp.float32) * s
    wm = jax.random.normal(keys[5], (h1, latent_dim), jnp.float32) * s
    bm = jax.random.normal(keys[6], (1, latent_dim), jnp.float32) * s
    wv = jax.random.normal(keys[7], (h1, latent_dim), jnp.float32) * s
    bv = jax.random.normal(keys[8], (1, latent_dim), jnp.float32) * s
    return {
        "w0e": w0e.astype(jnp.bfloat16),
        "w0c": w0c,                                   # VPU select path, f32
        "b0": b0,
        "w1": w1.astype(jnp.bfloat16),
        "b1": b1,
        "wh": jnp.concatenate([wm, wv], axis=1).astype(jnp.bfloat16),  # fused heads
        "bh": jnp.concatenate([bm, bv], axis=1),
    }


def encoder_reference(x, batch_labels, params, n_classes):
    """Pure-JAX reference mirroring the PyTorch forward (same bf16 casts)."""
    latent = params["wh"].shape[1] // 2
    xf = x.astype(jnp.bfloat16).astype(jnp.float32)
    onehot = jax.nn.one_hot(batch_labels, n_classes, dtype=jnp.float32)
    h = xf @ params["w0e"].astype(jnp.float32) + params["b0"] + onehot @ params["w0c"]
    h = _layernorm_relu(h)
    h = (h.astype(jnp.bfloat16).astype(jnp.float32)
         @ params["w1"].astype(jnp.float32) + params["b1"])
    h = _layernorm_relu(h)
    out = (h.astype(jnp.bfloat16).astype(jnp.float32)
           @ params["wh"].astype(jnp.float32) + params["bh"])
    return out[:, :latent], out[:, latent:]


if __name__ == "__main__":
    layer_sizes = [32, 64, 32]
    latent_dim = 8
    n_classes = 4
    B = 256          # batch grid: 2 tiles of 128 rows

    key = jax.random.PRNGKey(0)
    kx, kb, kp = jax.random.split(key, 3)

    x = jax.random.normal(kx, (B, layer_sizes[0]), jnp.float32)
    batch_labels = jax.random.randint(kb, (B,), 0, n_classes, jnp.int32)
    params = init_params(kp, layer_sizes, latent_dim, n_classes)

    means, log_vars = encoder_forward(x, batch_labels, params, n_classes, tb=128)
    jax.block_until_ready((means, log_vars))

    ref_means, ref_log_vars = encoder_reference(x, batch_labels, params, n_classes)
    assert means.shape == (B, latent_dim) and log_vars.shape == (B, latent_dim)
    assert jnp.allclose(means, ref_means, atol=1e-3, rtol=1e-3), \
        float(jnp.max(jnp.abs(means - ref_means)))
    assert jnp.allclose(log_vars, ref_log_vars, atol=1e-3, rtol=1e-3), \
        float(jnp.max(jnp.abs(log_vars - ref_log_vars)))

    print("KERNEL_OK")
</pallas_src>

<mosaic_0001>
module attributes {stable_mosaic.version = 11 : i64} {
  func.func @encoder_kernel(%arg0: i32, %arg1: memref<128x32xbf16, #tpu.memory_space<vmem>>, %arg2: memref<128x1xi32, #tpu.memory_space<vmem>>, %arg3: memref<32x64xbf16, #tpu.memory_space<vmem>>, %arg4: memref<4x64xf32, #tpu.memory_space<vmem>>, %arg5: memref<1x64xf32, #tpu.memory_space<vmem>>, %arg6: memref<64x32xbf16, #tpu.memory_space<vmem>>, %arg7: memref<1x32xf32, #tpu.memory_space<vmem>>, %arg8: memref<32x16xbf16, #tpu.memory_space<vmem>>, %arg9: memref<1x16xf32, #tpu.memory_space<vmem>>, %arg10: memref<128x16xf32, #tpu.memory_space<vmem>>) attributes {dimension_semantics = [#tpu.dimension_semantics<parallel>], iteration_bounds = array<i64: 2>, scalar_prefetch = 0 : i64, scratch_operands = 0 : i64, tpu.core_type = #tpu.core_type<tc>, window_params = [{transform_indices = @transform_0, window_bounds = array<i64: 128, 32>}, {transform_indices = @transform_1, window_bounds = array<i64: 128, 1>}, {pipeline_mode = #tpu.pipeline_mode<synchronous>, transform_indices = @transform_2, window_bounds = array<i64: 32, 64>}, {pipeline_mode = #tpu.pipeline_mode<synchronous>, transform_indices = @transform_3, window_bounds = array<i64: 4, 64>}, {pipeline_mode = #tpu.pipeline_mode<synchronous>, transform_indices = @transform_4, window_bounds = array<i64: 1, 64>}, {pipeline_mode = #tpu.pipeline_mode<synchronous>, transform_indices = @transform_5, window_bounds = array<i64: 64, 32>}, {pipeline_mode = #tpu.pipeline_mode<synchronous>, transform_indices = @transform_6, window_bounds = array<i64: 1, 32>}, {pipeline_mode = #tpu.pipeline_mode<synchronous>, transform_indices = @transform_7, window_bounds = array<i64: 32, 16>}, {pipeline_mode = #tpu.pipeline_mode<synchronous>, transform_indices = @transform_8, window_bounds = array<i64: 1, 16>}, {transform_indices = @transform_9, window_bounds = array<i64: 128, 16>}]} {
    %c0 = arith.constant 0 : index
    %c0_0 = arith.constant 0 : index
    %0 = vector.load %arg1[%c0, %c0_0] : memref<128x32xbf16, #tpu.memory_space<vmem>>, vector<128x32xbf16>
    %c0_1 = arith.constant 0 : index
    %c0_2 = arith.constant 0 : index
    %1 = vector.load %arg2[%c0_1, %c0_2] : memref<128x1xi32, #tpu.memory_space<vmem>>, vector<128x1xi32>
    %c0_3 = arith.constant 0 : index
    %c0_4 = arith.constant 0 : index
    %2 = vector.load %arg3[%c0_3, %c0_4] : memref<32x64xbf16, #tpu.memory_space<vmem>>, vector<32x64xbf16>
    %cst = arith.constant dense<0.000000e+00> : vector<128x64xf32>
    %3 = tpu.matmul %0, %2, %cst {dimension_numbers = #tpu.dot_dimension_numbers<[1], [0], [0], [1], [0, 0, 1, 1], [], []>} : vector<128x32xbf16>, vector<32x64xbf16>, vector<128x64xf32> -> vector<128x64xf32>
    %c0_5 = arith.constant 0 : index
    %c0_6 = arith.constant 0 : index
    %4 = vector.load %arg5[%c0_5, %c0_6] : memref<1x64xf32, #tpu.memory_space<vmem>>, vector<1x64xf32>
    %5 = vector.broadcast %4 : vector<1x64xf32> to vector<128x64xf32>
    %6 = arith.addf %3, %5 : vector<128x64xf32>
    %c0_7 = arith.constant 0 : index
    %c0_8 = arith.constant 0 : index
    %7 = vector.load %arg4[%c0_7, %c0_8] : memref<4x64xf32, #tpu.memory_space<vmem>>, vector<4x64xf32>
    %c0_i32 = arith.constant 0 : i32
    %8 = vector.broadcast %c0_i32 : i32 to vector<128x1xi32>
    %9 = arith.cmpi eq, %1, %8 : vector<128x1xi32>
    %10 = vector.extract_strided_slice %7 {offsets = [0, 0], sizes = [1, 64], strides = [1, 1]} : vector<4x64xf32> to vector<1x64xf32>
    %cst_9 = arith.constant 0.000000e+00 : f32
    %11 = vector.shape_cast %9 : vector<128x1xi1> to vector<128x1xi1>
    %12 = vector.broadcast %11 : vector<128x1xi1> to vector<128x64xi1>
    %13 = vector.shape_cast %10 : vector<1x64xf32> to vector<1x64xf32>
    %14 = vector.broadcast %13 : vector<1x64xf32> to vector<128x64xf32>
    %15 = vector.broadcast %cst_9 : f32 to vector<128x64xf32>
    %16 = arith.select %12, %14, %15 : vector<128x64xi1>, vector<128x64xf32>
    %17 = arith.addf %6, %16 : vector<128x64xf32>
    %c1_i32 = arith.constant 1 : i32
    %18 = vector.broadcast %c1_i32 : i32 to vector<128x1xi32>
    %19 = arith.cmpi eq, %1, %18 : vector<128x1xi32>
    %20 = vector.extract_strided_slice %7 {offsets = [1, 0], sizes = [1, 64], strides = [1, 1]} : vector<4x64xf32> to vector<1x64xf32>
    %cst_10 = arith.constant 0.000000e+00 : f32
    %21 = vector.shape_cast %19 : vector<128x1xi1> to vector<128x1xi1>
    %22 = vector.broadcast %21 : vector<128x1xi1> to vector<128x64xi1>
    %23 = vector.shape_cast %20 : vector<1x64xf32> to vector<1x64xf32>
    %24 = vector.broadcast %23 : vector<1x64xf32> to vector<128x64xf32>
    %25 = vector.broadcast %cst_10 : f32 to vector<128x64xf32>
    %26 = arith.select %22, %24, %25 : vector<128x64xi1>, vector<128x64xf32>
    %27 = arith.addf %17, %26 : vector<128x64xf32>
    %c2_i32 = arith.constant 2 : i32
    %28 = vector.broadcast %c2_i32 : i32 to vector<128x1xi32>
    %29 = arith.cmpi eq, %1, %28 : vector<128x1xi32>
    %30 = vector.extract_strided_slice %7 {offsets = [2, 0], sizes = [1, 64], strides = [1, 1]} : vector<4x64xf32> to vector<1x64xf32>
    %cst_11 = arith.constant 0.000000e+00 : f32
    %31 = vector.shape_cast %29 : vector<128x1xi1> to vector<128x1xi1>
    %32 = vector.broadcast %31 : vector<128x1xi1> to vector<128x64xi1>
    %33 = vector.shape_cast %30 : vector<1x64xf32> to vector<1x64xf32>
    %34 = vector.broadcast %33 : vector<1x64xf32> to vector<128x64xf32>
    %35 = vector.broadcast %cst_11 : f32 to vector<128x64xf32>
    %36 = arith.select %32, %34, %35 : vector<128x64xi1>, vector<128x64xf32>
    %37 = arith.addf %27, %36 : vector<128x64xf32>
    %c3_i32 = arith.constant 3 : i32
    %38 = vector.broadcast %c3_i32 : i32 to vector<128x1xi32>
    %39 = arith.cmpi eq, %1, %38 : vector<128x1xi32>
    %40 = vector.extract_strided_slice %7 {offsets = [3, 0], sizes = [1, 64], strides = [1, 1]} : vector<4x64xf32> to vector<1x64xf32>
    %cst_12 = arith.constant 0.000000e+00 : f32
    %41 = vector.shape_cast %39 : vector<128x1xi1> to vector<128x1xi1>
    %42 = vector.broadcast %41 : vector<128x1xi1> to vector<128x64xi1>
    %43 = vector.shape_cast %40 : vector<1x64xf32> to vector<1x64xf32>
    %44 = vector.broadcast %43 : vector<1x64xf32> to vector<128x64xf32>
    %45 = vector.broadcast %cst_12 : f32 to vector<128x64xf32>
    %46 = arith.select %42, %44, %45 : vector<128x64xi1>, vector<128x64xf32>
    %47 = arith.addf %37, %46 : vector<128x64xf32>
    %cst_13 = arith.constant dense<0.000000e+00> : vector<128xf32>
    %48 = vector.multi_reduction <add>, %47, %cst_13 [1] : vector<128x64xf32> to vector<128xf32>
    %49 = vector.shape_cast %48 : vector<128xf32> to vector<128x1xf32>
    %cst_14 = arith.constant 6.400000e+01 : f32
    %50 = vector.broadcast %cst_14 : f32 to vector<128x1xf32>
    %51 = arith.divf %49, %50 : vector<128x1xf32>
    %52 = arith.mulf %47, %47 : vector<128x64xf32>
    %cst_15 = arith.constant dense<0.000000e+00> : vector<128xf32>
    %53 = vector.multi_reduction <add>, %52, %cst_15 [1] : vector<128x64xf32> to vector<128xf32>
    %54 = vector.shape_cast %53 : vector<128xf32> to vector<128x1xf32>
    %cst_16 = arith.constant 6.400000e+01 : f32
    %55 = vector.broadcast %cst_16 : f32 to vector<128x1xf32>
    %56 = arith.divf %54, %55 : vector<128x1xf32>
    %57 = arith.mulf %51, %51 : vector<128x1xf32>
    %58 = arith.subf %56, %57 : vector<128x1xf32>
    %cst_17 = arith.constant 0.000000e+00 : f32
    %59 = vector.broadcast %cst_17 : f32 to vector<128x1xf32>
    %60 = arith.maximumf %58, %59 : vector<128x1xf32>
    %61 = vector.broadcast %51 : vector<128x1xf32> to vector<128x64xf32>
    %62 = arith.subf %47, %61 : vector<128x64xf32>
    %cst_18 = arith.constant 9.99999974E-6 : f32
    %63 = vector.broadcast %cst_18 : f32 to vector<128x1xf32>
    %64 = arith.addf %60, %63 : vector<128x1xf32>
    %65 = math.rsqrt %64 : vector<128x1xf32>
    %66 = vector.broadcast %65 : vector<128x1xf32> to vector<128x64xf32>
    %67 = arith.mulf %62, %66 : vector<128x64xf32>
    %cst_19 = arith.constant 0.000000e+00 : f32
    %68 = vector.broadcast %cst_19 : f32 to vector<128x64xf32>
    %69 = arith.maximumf %67, %68 : vector<128x64xf32>
    %70 = arith.truncf %69 : vector<128x64xf32> to vector<128x64xbf16>
    %c0_20 = arith.constant 0 : index
    %c0_21 = arith.constant 0 : index
    %71 = vector.load %arg6[%c0_20, %c0_21] : memref<64x32xbf16, #tpu.memory_space<vmem>>, vector<64x32xbf16>
    %cst_22 = arith.constant dense<0.000000e+00> : vector<128x32xf32>
    %72 = tpu.matmul %70, %71, %cst_22 {dimension_numbers = #tpu.dot_dimension_numbers<[1], [0], [0], [1], [0, 0, 1, 1], [], []>} : vector<128x64xbf16>, vector<64x32xbf16>, vector<128x32xf32> -> vector<128x32xf32>
    %c0_23 = arith.constant 0 : index
    %c0_24 = arith.constant 0 : index
    %73 = vector.load %arg7[%c0_23, %c0_24] : memref<1x32xf32, #tpu.memory_space<vmem>>, vector<1x32xf32>
    %74 = vector.broadcast %73 : vector<1x32xf32> to vector<128x32xf32>
    %75 = arith.addf %72, %74 : vector<128x32xf32>
    %cst_25 = arith.constant dense<0.000000e+00> : vector<128xf32>
    %76 = vector.multi_reduction <add>, %75, %cst_25 [1] : vector<128x32xf32> to vector<128xf32>
    %77 = vector.shape_cast %76 : vector<128xf32> to vector<128x1xf32>
    %cst_26 = arith.constant 3.200000e+01 : f32
    %78 = vector.broadcast %cst_26 : f32 to vector<128x1xf32>
    %79 = arith.divf %77, %78 : vector<128x1xf32>
    %80 = arith.mulf %75, %75 : vector<128x32xf32>
    %cst_27 = arith.constant dense<0.000000e+00> : vector<128xf32>
    %81 = vector.multi_reduction <add>, %80, %cst_27 [1] : vector<128x32xf32> to vector<128xf32>
    %82 = vector.shape_cast %81 : vector<128xf32> to vector<128x1xf32>
    %cst_28 = arith.constant 3.200000e+01 : f32
    %83 = vector.broadcast %cst_28 : f32 to vector<128x1xf32>
    %84 = arith.divf %82, %83 : vector<128x1xf32>
    %85 = arith.mulf %79, %79 : vector<128x1xf32>
    %86 = arith.subf %84, %85 : vector<128x1xf32>
    %cst_29 = arith.constant 0.000000e+00 : f32
    %87 = vector.broadcast %cst_29 : f32 to vector<128x1xf32>
    %88 = arith.maximumf %86, %87 : vector<128x1xf32>
    %89 = vector.broadcast %79 : vector<128x1xf32> to vector<128x32xf32>
    %90 = arith.subf %75, %89 : vector<128x32xf32>
    %cst_30 = arith.constant 9.99999974E-6 : f32
    %91 = vector.broadcast %cst_30 : f32 to vector<128x1xf32>
    %92 = arith.addf %88, %91 : vector<128x1xf32>
    %93 = math.rsqrt %92 : vector<128x1xf32>
    %94 = vector.broadcast %93 : vector<128x1xf32> to vector<128x32xf32>
    %95 = arith.mulf %90, %94 : vector<128x32xf32>
    %cst_31 = arith.constant 0.000000e+00 : f32
    %96 = vector.broadcast %cst_31 : f32 to vector<128x32xf32>
    %97 = arith.maximumf %95, %96 : vector<128x32xf32>
    %98 = arith.truncf %97 : vector<128x32xf32> to vector<128x32xbf16>
    %c0_32 = arith.constant 0 : index
    %c0_33 = arith.constant 0 : index
    %99 = vector.load %arg8[%c0_32, %c0_33] : memref<32x16xbf16, #tpu.memory_space<vmem>>, vector<32x16xbf16>
    %cst_34 = arith.constant dense<0.000000e+00> : vector<128x16xf32>
    %100 = tpu.matmul %98, %99, %cst_34 {dimension_numbers = #tpu.dot_dimension_numbers<[1], [0], [0], [1], [0, 0, 1, 1], [], []>} : vector<128x32xbf16>, vector<32x16xbf16>, vector<128x16xf32> -> vector<128x16xf32>
    %c0_35 = arith.constant 0 : index
    %c0_36 = arith.constant 0 : index
    %101 = vector.load %arg9[%c0_35, %c0_36] : memref<1x16xf32, #tpu.memory_space<vmem>>, vector<1x16xf32>
    %102 = vector.broadcast %101 : vector<1x16xf32> to vector<128x16xf32>
    %103 = arith.addf %100, %102 : vector<128x16xf32>
    %c0_37 = arith.constant 0 : index
    %c0_38 = arith.constant 0 : index
    %104 = vector.load %arg10[%c0_37, %c0_38] : memref<128x16xf32, #tpu.memory_space<vmem>>, vector<128x16xf32>
    tpu.vector_store %arg10[%c0_37, %c0_38], %103 {strides = array<i32>} : memref<128x16xf32, #tpu.memory_space<vmem>>, vector<128x16xf32>,
    return
  }
  func.func @transform_0(%arg0: i32) -> (i32, i32) {
    %c0_i32 = arith.constant 0 : i32
    %c0_i32_0 = arith.constant 0 : i32
    return %arg0, %c0_i32 : i32, i32
  }
  func.func @transform_1(%arg0: i32) -> (i32, i32) {
    %c0_i32 = arith.constant 0 : i32
    %c0_i32_0 = arith.constant 0 : i32
    return %arg0, %c0_i32 : i32, i32
  }
  func.func @transform_2(%arg0: i32) -> (i32, i32) {
    %c0_i32 = arith.constant 0 : i32
    %c0_i32_0 = arith.constant 0 : i32
    %c0_i32_1 = arith.constant 0 : i32
    return %c0_i32, %c0_i32_0 : i32, i32
  }
  func.func @transform_3(%arg0: i32) -> (i32, i32) {
    %c0_i32 = arith.constant 0 : i32
    %c0_i32_0 = arith.constant 0 : i32
    %c0_i32_1 = arith.constant 0 : i32
    return %c0_i32, %c0_i32_0 : i32, i32
  }
  func.func @transform_4(%arg0: i32) -> (i32, i32) {
    %c0_i32 = arith.constant 0 : i32
    %c0_i32_0 = arith.constant 0 : i32
    %c0_i32_1 = arith.constant 0 : i32
    return %c0_i32, %c0_i32_0 : i32, i32
  }
  func.func @transform_5(%arg0: i32) -> (i32, i32) {
    %c0_i32 = arith.constant 0 : i32
    %c0_i32_0 = arith.constant 0 : i32
    %c0_i32_1 = arith.constant 0 : i32
    return %c0_i32, %c0_i32_0 : i32, i32
  }
  func.func @transform_6(%arg0: i32) -> (i32, i32) {
    %c0_i32 = arith.constant 0 : i32
    %c0_i32_0 = arith.constant 0 : i32
    %c0_i32_1 = arith.constant 0 : i32
    return %c0_i32, %c0_i32_0 : i32, i32
  }
  func.func @transform_7(%arg0: i32) -> (i32, i32) {
    %c0_i32 = arith.constant 0 : i32
    %c0_i32_0 = arith.constant 0 : i32
    %c0_i32_1 = arith.constant 0 : i32
    return %c0_i32, %c0_i32_0 : i32, i32
  }
  func.func @transform_8(%arg0: i32) -> (i32, i32) {
    %c0_i32 = arith.constant 0 : i32
    %c0_i32_0 = arith.constant 0 : i32
    %c0_i32_1 = arith.constant 0 : i32
    return %c0_i32, %c0_i32_0 : i32, i32
  }
  func.func @transform_9(%arg0: i32) -> (i32, i32) {
    %c0_i32 = arith.constant 0 : i32
    %c0_i32_0 = arith.constant 0 : i32
    return %arg0, %c0_i32 : i32, i32
  }
}

</mosaic_0001>

<llo_original>
// kernel: tpu_custom_call.1
$region0: #{tpu_custom_call.1}
  #allocation0 [shape = 'u32[]', space=smem, size = 0x4, offset = 0x4, fixed_abs, tag = 'smem constant byte address 0x4 - core index']
  #allocation1 [shape = 'u32[144,128]{1,0:T(1,128)}', space=vmem, size = 0x12000, scoped, tag = 'internal scratch']
  %s0 = inlined_call_operand.vmem [shape: bf16[256,32], index: 0, kind: input, shape index: {}]
  %s1 = inlined_call_operand.vmem [shape: s32[256,1], index: 1, kind: input, shape index: {}]
  %s2 = inlined_call_operand.vmem [shape: bf16[32,64], index: 2, kind: input, shape index: {}]
  %s3 = inlined_call_operand.vmem [shape: f32[4,64], index: 3, kind: input, shape index: {}]
  %s4 = inlined_call_operand.vmem [shape: f32[1,64], index: 4, kind: input, shape index: {}]
  %s5 = inlined_call_operand.vmem [shape: bf16[64,32], index: 5, kind: input, shape index: {}]
  %s6 = inlined_call_operand.vmem [shape: f32[1,32], index: 6, kind: input, shape index: {}]
  %s7 = inlined_call_operand.vmem [shape: bf16[32,16], index: 7, kind: input, shape index: {}]
  %s8 = inlined_call_operand.vmem [shape: f32[1,16], index: 8, kind: input, shape index: {}]
  %s9 = inlined_call_operand.vmem [shape: f32[256,16], index: 9, kind: output, shape index: {}]
  %s10 = sld [smem:[#allocation0]]
  $region69: #{tpu_custom_call.1} parent=0
    _
  %s12 = ssub.s32 1, %s10
  %s13 = scalar_select 0, %s12, %s10
  loop: start=0, step=1, limit=4
  $region2: #{tpu_custom_call.1} parent=0 // loop_pre_header
    _
  $region3: #{tpu_custom_call.1} parent=0 // loop_header
    %s15 = sphi 0, %s19
    %p16 = scmp.ge.s32.totalorder %s15, 4
    %s25 = sphi 0, %s27
    %s28 = sphi 0, %s25
    %s29 = sphi 0, %s28
    %s45 = sphi 0, %s29
    %s51 = sphi 0, %s53
    %s54 = sphi 0, %s51
    %s55 = sphi 0, %s54
    %s71 = sphi 0, %s55
    %s75 = sphi 0, %s75
    %s77 = sphi 0, %s75
    %s78 = sphi 0, %s77
    %s92 = sphi 0, %s78
    %s96 = sphi 0, %s96
    %s98 = sphi 0, %s96
    %s99 = sphi 0, %s98
    %s113 = sphi 0, %s99
    %s117 = sphi 0, %s117
    %s119 = sphi 0, %s117
    %s120 = sphi 0, %s119
    %s134 = sphi 0, %s120
    %s138 = sphi 0, %s138
    %s140 = sphi 0, %s138
    %s141 = sphi 0, %s140
    %s155 = sphi 0, %s141
    %s159 = sphi 0, %s159
    %s161 = sphi 0, %s159
    %s162 = sphi 0, %s161
    %s176 = sphi 0, %s162
    %s180 = sphi 0, %s180
    %s182 = sphi 0, %s180
    %s183 = sphi 0, %s182
    %s197 = sphi 0, %s183
    %s201 = sphi 0, %s201
    %s203 = sphi 0, %s201
    %s204 = sphi 0, %s203
    %s218 = sphi 0, %s204
    %s224 = sphi 0, %s226
    %s227 = sphi 0, %s224
    %s228 = sphi 0, %s227
    %s244 = sphi 0, %s228
  $region4: #{tpu_custom_call.1} parent=0 // loop_header_branch
    %18 = sbr.rel (%p16) target = $region8
  $region5: #{tpu_custom_call.1} parent=0 // loop_body
    %s20 = ssub.s32 %s15, 1
    %s21 = ssub.s32 %s15, 2
    %s22 = sadd.s32 %s15, 1
    %s23 = ssub.s32 %s15, %s22
    %p24 = scmp.eq.s32.totalorder %s23, 0
    %s26 = sadd.s32 %s25, 1
    %s27 = scalar_select %p24, %s25, %s26
    %p30 = pneg %p24
    %p31 = scmp.eq.s32.totalorder %s15, 1
    %p32 = por %p30, %p31
    %p33 = scmp.ne.s32.totalorder %s25, %s28
    %p34 = scmp.eq.s32.totalorder %s15, 0
    %p35 = por %p33, %p34
    %p36 = scmp.ne.s32.totalorder %s25, %s28
    %p37 = scmp.eq.s32.totalorder %s20, 1
    %p38 = por %p36, %p37
    %p39 = scmp.ne.s32.totalorder %s28, %s29
    %p40 = scmp.eq.s32.totalorder %s20, 0
    %p41 = por %p39, %p40
    %p42 = scmp.ne.s32.totalorder %s28, %s29
    %p43 = scmp.eq.s32.totalorder %s21, 1
    %p44 = por %p42, %p43
    %p46 = scmp.ne.s32.totalorder %s29, %s45
    %p47 = scmp.eq.s32.totalorder %s21, 0
    %p48 = por %p46, %p47
    %s49 = ssub.s32 %s15, %s22
    %p50 = scmp.eq.s32.totalorder %s49, 0
    %s52 = sadd.s32 %s51, 1
    %s53 = scalar_select %p50, %s51, %s52
    %p56 = pneg %p50
    %p57 = scmp.eq.s32.totalorder %s15, 1
    %p58 = por %p56, %p57
    %p59 = scmp.ne.s32.totalorder %s51, %s54
    %p60 = scmp.eq.s32.totalorder %s15, 0
    %p61 = por %p59, %p60
    %p62 = scmp.ne.s32.totalorder %s51, %s54
    %p63 = scmp.eq.s32.totalorder %s20, 1
    %p64 = por %p62, %p63
    %p65 = scmp.ne.s32.totalorder %s54, %s55
    %p66 = scmp.eq.s32.totalorder %s20, 0
    %p67 = por %p65, %p66
    %p68 = scmp.ne.s32.totalorder %s54, %s55
    %p69 = scmp.eq.s32.totalorder %s21, 1
    %p70 = por %p68, %p69
    %p72 = scmp.ne.s32.totalorder %s55, %s71
    %p73 = scmp.eq.s32.totalorder %s21, 0
    %p74 = por %p72, %p73
    %s76 = sadd.s32 %s75, 1
    %p79 = scmp.eq.s32.totalorder %s15, 1
    %p80 = scmp.ne.s32.totalorder %s75, %s77
    %p81 = scmp.eq.s32.totalorder %s15, 0
    %p82 = por %p80, %p81
    %p83 = scmp.ne.s32.totalorder %s75, %s77
    %p84 = scmp.eq.s32.totalorder %s20, 1
    %p85 = por %p83, %p84
    %p86 = scmp.ne.s32.totalorder %s77, %s78
    %p87 = scmp.eq.s32.totalorder %s20, 0
    %p88 = por %p86, %p87
    %p89 = scmp.ne.s32.totalorder %s77, %s78
    %p90 = scmp.eq.s32.totalorder %s21, 1
    %p91 = por %p89, %p90
    %p93 = scmp.ne.s32.totalorder %s78, %s92
    %p94 = scmp.eq.s32.totalorder %s21, 0
    %p95 = por %p93, %p94
    %s97 = sadd.s32 %s96, 1
    %p100 = scmp.eq.s32.totalorder %s15, 1
    %p101 = scmp.ne.s32.totalorder %s96, %s98
    %p102 = scmp.eq.s32.totalorder %s15, 0
    %p103 = por %p101, %p102
    %p104 = scmp.ne.s32.totalorder %s96, %s98
    %p105 = scmp.eq.s32.totalorder %s20, 1
    %p106 = por %p104, %p105
    %p107 = scmp.ne.s32.totalorder %s98, %s99
    %p108 = scmp.eq.s32.totalorder %s20, 0
    %p109 = por %p107, %p108
    %p110 = scmp.ne.s32.totalorder %s98, %s99
    %p111 = scmp.eq.s32.totalorder %s21, 1
    %p112 = por %p110, %p111
    %p114 = scmp.ne.s32.totalorder %s99, %s113
    %p115 = scmp.eq.s32.totalorder %s21, 0
    %p116 = por %p114, %p115
    %s118 = sadd.s32 %s117, 1
    %p121 = scmp.eq.s32.totalorder %s15, 1
    %p122 = scmp.ne.s32.totalorder %s117, %s119
    %p123 = scmp.eq.s32.totalorder %s15, 0
    %p124 = por %p122, %p123
    %p125 = scmp.ne.s32.totalorder %s117, %s119
    %p126 = scmp.eq.s32.totalorder %s20, 1
    %p127 = por %p125, %p126
    %p128 = scmp.ne.s32.totalorder %s119, %s120
    %p129 = scmp.eq.s32.totalorder %s20, 0
    %p130 = por %p128, %p129
    %p131 = scmp.ne.s32.totalorder %s119, %s120
    %p132 = scmp.eq.s32.totalorder %s21, 1
    %p133 = por %p131, %p132
    %p135 = scmp.ne.s32.totalorder %s120, %s134
    %p136 = scmp.eq.s32.totalorder %s21, 0
    %p137 = por %p135, %p136
    %s139 = sadd.s32 %s138, 1
    %p142 = scmp.eq.s32.totalorder %s15, 1
    %p143 = scmp.ne.s32.totalorder %s138, %s140
    %p144 = scmp.eq.s32.totalorder %s15, 0
    %p145 = por %p143, %p144
    %p146 = scmp.ne.s32.totalorder %s138, %s140
    %p147 = scmp.eq.s32.totalorder %s20, 1
    %p148 = por %p146, %p147
    %p149 = scmp.ne.s32.totalorder %s140, %s141
    %p150 = scmp.eq.s32.totalorder %s20, 0
    %p151 = por %p149, %p150
    %p152 = scmp.ne.s32.totalorder %s140, %s141
    %p153 = scmp.eq.s32.totalorder %s21, 1
    %p154 = por %p152, %p153
    %p156 = scmp.ne.s32.totalorder %s141, %s155
    %p157 = scmp.eq.s32.totalorder %s21, 0
    %p158 = por %p156, %p157
    %s160 = sadd.s32 %s159, 1
    %p163 = scmp.eq.s32.totalorder %s15, 1
    %p164 = scmp.ne.s32.totalorder %s159, %s161
    %p165 = scmp.eq.s32.totalorder %s15, 0
    %p166 = por %p164, %p165
    %p167 = scmp.ne.s32.totalorder %s159, %s161
    %p168 = scmp.eq.s32.totalorder %s20, 1
    %p169 = por %p167, %p168
    %p170 = scmp.ne.s32.totalorder %s161, %s162
    %p171 = scmp.eq.s32.totalorder %s20, 0
    %p172 = por %p170, %p171
    %p173 = scmp.ne.s32.totalorder %s161, %s162
    %p174 = scmp.eq.s32.totalorder %s21, 1
    %p175 = por %p173, %p174
    %p177 = scmp.ne.s32.totalorder %s162, %s176
    %p178 = scmp.eq.s32.totalorder %s21, 0
    %p179 = por %p177, %p178
    %s181 = sadd.s32 %s180, 1
    %p184 = scmp.eq.s32.totalorder %s15, 1
    %p185 = scmp.ne.s32.totalorder %s180, %s182
    %p186 = scmp.eq.s32.totalorder %s15, 0
    %p187 = por %p185, %p186
    %p188 = scmp.ne.s32.totalorder %s180, %s182
    %p189 = scmp.eq.s32.totalorder %s20, 1
    %p190 = por %p188, %p189
    %p191 = scmp.ne.s32.totalorder %s182, %s183
    %p192 = scmp.eq.s32.totalorder %s20, 0
    %p193 = por %p191, %p192
    %p194 = scmp.ne.s32.totalorder %s182, %s183
    %p195 = scmp.eq.s32.totalorder %s21, 1
    %p196 = por %p194, %p195
    %p198 = scmp.ne.s32.totalorder %s183, %s197
    %p199 = scmp.eq.s32.totalorder %s21, 0
    %p200 = por %p198, %p199
    %s202 = sadd.s32 %s201, 1
    %p205 = scmp.eq.s32.totalorder %s15, 1
    %p206 = scmp.ne.s32.totalorder %s201, %s203
    %p207 = scmp.eq.s32.totalorder %s15, 0
    %p208 = por %p206, %p207
    %p209 = scmp.ne.s32.totalorder %s201, %s203
    %p210 = scmp.eq.s32.totalorder %s20, 1
    %p211 = por %p209, %p210
    %p212 = scmp.ne.s32.totalorder %s203, %s204
    %p213 = scmp.eq.s32.totalorder %s20, 0
    %p214 = por %p212, %p213
    %p215 = scmp.ne.s32.totalorder %s203, %s204
    %p216 = scmp.eq.s32.totalorder %s21, 1
    %p217 = por %p215, %p216
    %p219 = scmp.ne.s32.totalorder %s204, %s218
    %p220 = scmp.eq.s32.totalorder %s21, 0
    %p221 = por %p219, %p220
    %s222 = ssub.s32 %s15, %s22
    %p223 = scmp.eq.s32.totalorder %s222, 0
    %s225 = sadd.s32 %s224, 1
    %s226 = scalar_select %p223, %s224, %s225
    %p229 = pneg %p223
    %p230 = scmp.eq.s32.totalorder %s15, 1
    %p231 = por %p229, %p230
    %p232 = scmp.ne.s32.totalorder %s224, %s227
    %p233 = scmp.eq.s32.totalorder %s15, 0
    %p234 = por %p232, %p233
    %p235 = scmp.ne.s32.totalorder %s224, %s227
    %p236 = scmp.eq.s32.totalorder %s20, 1
    %p237 = por %p235, %p236
    %p238 = scmp.ne.s32.totalorder %s227, %s228
    %p239 = scmp.eq.s32.totalorder %s20, 0
    %p240 = por %p238, %p239
    %p241 = scmp.ne.s32.totalorder %s227, %s228
    %p242 = scmp.eq.s32.totalorder %s21, 1
    %p243 = por %p241, %p242
    %p245 = scmp.ne.s32.totalorder %s228, %s244
    %p246 = scmp.eq.s32.totalorder %s21, 0
    %p247 = por %p245, %p246
    %p248 = scmp.le.s32.totalorder 1, %s15
    %p249 = scmp.lt.s32.totalorder %s15, 3
    %p250 = pnand %p248, %p249
    %p251 = pneg %p250
    // Predicated region
    $region9: #{tpu_custom_call.1} parent=5 // pred_check
      _
    $region10: #{tpu_custom_call.1} parent=5 // pred_check_branch
      %253 = sbr.rel (%p250) target = $region12
    $region11: #{tpu_custom_call.1} parent=5 // pred_region
      %s254 = ssub.s32 %s15, 1
      // Predicated region
      $region13: #{tpu_custom_call.1} parent=11 // pred_check
        %p255 = pneg %p88
      $region14: #{tpu_custom_call.1} parent=11 // pred_check_branch
        %257 = sbr.rel (%p255) target = $region16
      $region15: #{tpu_custom_call.1} parent=11 // pred_region
        _
      $region16: #{tpu_custom_call.1} parent=11 // pred_fallthru
        _
      // Predicated region
      $region17: #{tpu_custom_call.1} parent=11 // pred_check
        %p258 = pneg %p109
      $region18: #{tpu_custom_call.1} parent=11 // pred_check_branch
        %260 = sbr.rel (%p258) target = $region20
      $region19: #{tpu_custom_call.1} parent=11 // pred_region
        _
      $region20: #{tpu_custom_call.1} parent=11 // pred_fallthru
        _
      // Predicated region
      $region21: #{tpu_custom_call.1} parent=11 // pred_check
        %p261 = pneg %p130
      $region22: #{tpu_custom_call.1} parent=11 // pred_check_branch
        %263 = sbr.rel (%p261) target = $region24
      $region23: #{tpu_custom_call.1} parent=11 // pred_region
        _
      $region24: #{tpu_custom_call.1} parent=11 // pred_fallthru
        _
      // Predicated region
      $region25: #{tpu_custom_call.1} parent=11 // pred_check
        %p264 = pneg %p151
      $region26: #{tpu_custom_call.1} parent=11 // pred_check_branch
        %266 = sbr.rel (%p264) target = $region28
      $region27: #{tpu_custom_call.1} parent=11 // pred_region
        _
      $region28: #{tpu_custom_call.1} parent=11 // pred_fallthru
        _
      // Predicated region
      $region29: #{tpu_custom_call.1} parent=11 // pred_check
        %p267 = pneg %p172
      $region30: #{tpu_custom_call.1} parent=11 // pred_check_branch
        %269 = sbr.rel (%p267) target = $region32
      $region31: #{tpu_custom_call.1} parent=11 // pred_region
        _
      $region32: #{tpu_custom_call.1} parent=11 // pred_fallthru
        _
      // Predicated region
      $region33: #{tpu_custom_call.1} parent=11 // pred_check
        %p270 = pneg %p193
      $region34: #{tpu_custom_call.1} parent=11 // pred_check_branch
        %272 = sbr.rel (%p270) target = $region36
      $region35: #{tpu_custom_call.1} parent=11 // pred_region
        _
      $region36: #{tpu_custom_call.1} parent=11 // pred_fallthru
        _
      // Predicated region
      $region37: #{tpu_custom_call.1} parent=11 // pred_check
        %p273 = pneg %p214
      $region38: #{tpu_custom_call.1} parent=11 // pred_check_branch
        %275 = sbr.rel (%p273) target = $region40
      $region39: #{tpu_custom_call.1} parent=11 // pred_region
        _
      $region40: #{tpu_custom_call.1} parent=11 // pred_fallthru
        _
    $region12: #{tpu_custom_call.1} parent=5 // pred_fallthru
      _
    %p276 = scmp.lt.s32.totalorder %s15, 2
    // Predicated region
    $region41: #{tpu_custom_call.1} parent=5 // pred_check
      %p277 = pneg %p276
    $region42: #{tpu_custom_call.1} parent=5 // pred_check_branch
      %279 = sbr.rel (%p277) target = $region44
    $region43: #{tpu_custom_call.1} parent=5 // pred_region
      // Predicated region
      $region45: #{tpu_custom_call.1} parent=43 // pred_check
        %p280 = pneg %p35
      $region46: #{tpu_custom_call.1} parent=43 // pred_check_branch
        %282 = sbr.rel (%p280) target = $region48
      $region47: #{tpu_custom_call.1} parent=43 // pred_region
        %s283 = smul.u32 16, %s15
        %p284 = scmp.lt.s32.totalorder %s283, 31
        %s285 = scalar_select %p284, %s283, 31
        %s286 = smul.addr %s285, 4
        %s287 = scalar_lea.vmem %s0, %s286
        %s288 = smul.u32 16, %s15
      $region48: #{tpu_custom_call.1} parent=43 // pred_fallthru
        _
      // Predicated region
      $region49: #{tpu_custom_call.1} parent=43 // pred_check
        %p289 = pneg %p61
      $region50: #{tpu_custom_call.1} parent=43 // pred_check_branch
        %291 = sbr.rel (%p289) target = $region52
      $region51: #{tpu_custom_call.1} parent=43 // pred_region
        %s292 = smul.u32 16, %s15
        %p293 = scmp.lt.s32.totalorder %s292, 31
        %s294 = scalar_select %p293, %s292, 31
        %s295 = smul.addr %s294, 8
        %s296 = scalar_lea.vmem %s1, %s295
        %s297 = smul.u32 16, %s15
      $region52: #{tpu_custom_call.1} parent=43 // pred_fallthru
        _
    $region44: #{tpu_custom_call.1} parent=5 // pred_fallthru
      _
    %p298 = scmp.le.s32.totalorder 1, %s15
    %p299 = scmp.lt.s32.totalorder %s15, 3
    %p300 = pnand %p298, %p299
    %p301 = pneg %p300
    // Predicated region
    $region53: #{tpu_custom_call.1} parent=5 // pred_check
      _
    $region54: #{tpu_custom_call.1} parent=5 // pred_check_branch
      %303 = sbr.rel (%p300) target = $region56
    $region55: #{tpu_custom_call.1} parent=5 // pred_region
      %s304 = ssub.s32 %s15, 1
      %s305 = smul.u32 16, %s20
      %p306 = scmp.lt.s32.totalorder %s305, 31
      %s307 = scalar_select %p306, %s305, 31
      %s308 = smul.addr %s307, 4
      %s309 = scalar_lea.vmem %s0, %s308
      %p310 = pneg %p41
      %p311 = pneg %p38
      %s312 = smul.u32 16, %s20
      %p313 = scmp.lt.s32.totalorder %s312, 31
      %s314 = scalar_select %p313, %s312, 31
      %s315 = smul.addr %s314, 8
      %s316 = scalar_lea.vmem %s1, %s315
      %p317 = pneg %p67
      %p318 = pneg %p64
      %p319 = pneg %p88
      %p320 = pneg %p85
      %p321 = pneg %p109
      %p322 = pneg %p106
      %p323 = pneg %p130
      %p324 = pneg %p127
      %p325 = pneg %p151
      %p326 = pneg %p148
      %p327 = pneg %p172
      %p328 = pneg %p169
      %p329 = pneg %p193
      %p330 = pneg %p190
      %p331 = pneg %p214
      %p332 = pneg %p211
      %p333 = pneg %p240
      %p334 = pneg %p237
      %s335 = smul.u32 16, %s20
      %p336 = scmp.lt.s32.totalorder %s335, 31
      %s337 = scalar_select %p336, %s335, 31
      %s338 = smul.addr %s337, 8
      %s339 = scalar_lea.vmem %s9, %s338
      %s340 = smul.u32 16, %s20
      %p341 = scmp.lt.s32.totalorder %s340, 31
      %s342 = scalar_select %p341, %s340, 31
      %s343 = smul.addr %s342, 4
      %s344 = scalar_lea.vmem %s0, %s343
      %s345 = smul.u32 16, %s20
      %s346 = smul.u32 16, %s20
      %p347 = scmp.lt.s32.totalorder %s346, 31
      %s348 = scalar_select %p347, %s346, 31
      %s349 = smul.addr %s348, 8
      %s350 = scalar_lea.vmem %s1, %s349
      %s351 = smul.u32 16, %s20
      %s352 = smul.u32 16, %s20
      %p353 = scmp.lt.s32.totalorder %s352, 31
      %s354 = scalar_select %p353, %s352, 31
      %s355 = smul.addr %s354, 8
      %s356 = scalar_lea.vmem %s9, %s355
      %s357 = smul.u32 16, %s20
      %v359 = vld [vmem:[%s344] sm:$0xf]
      %v360 = vld [vmem:[%s344 + $0x4] sm:$0xf]
      %v361 = vld [vmem:[%s344 + $0x8] sm:$0xf]
      %v362 = vld [vmem:[%s344 + $0xc] sm:$0xf]
      %v363 = vld [vmem:[%s344 + $0x10] sm:$0xf]
      %v364 = vld [vmem:[%s344 + $0x14] sm:$0xf]
      %v365 = vld [vmem:[%s344 + $0x18] sm:$0xf]
      %v366 = vld [vmem:[%s344 + $0x1c] sm:$0xf]
      %v367 = vld [vmem:[%s344 + $0x20] sm:$0xf]
      %v368 = vld [vmem:[%s344 + $0x24] sm:$0xf]
      %v369 = vld [vmem:[%s344 + $0x28] sm:$0xf]
      %v370 = vld [vmem:[%s344 + $0x2c] sm:$0xf]
      %v371 = vld [vmem:[%s344 + $0x30] sm:$0xf]
      %v372 = vld [vmem:[%s344 + $0x34] sm:$0xf]
      %v373 = vld [vmem:[%s344 + $0x38] sm:$0xf]
      %v374 = vld [vmem:[%s344 + $0x3c] sm:$0xf]
      %v375 = vld [vmem:[%s350] sm:$0xff]
      %v376 = vld [vmem:[%s350 + $0x8] sm:$0xff]
      %v377 = vld [vmem:[%s350 + $0x10] sm:$0xff]
      %v378 = vld [vmem:[%s350 + $0x18] sm:$0xff]
      %v379 = vld [vmem:[%s350 + $0x20] sm:$0xff]
      %v380 = vld [vmem:[%s350 + $0x28] sm:$0xff]
      %v381 = vld [vmem:[%s350 + $0x30] sm:$0xff]
      %v382 = vld [vmem:[%s350 + $0x38] sm:$0xff]
      %v383 = vld [vmem:[%s350 + $0x40] sm:$0xff]
      %v384 = vld [vmem:[%s350 + $0x48] sm:$0xff]
      %v385 = vld [vmem:[%s350 + $0x50] sm:$0xff]
      %v386 = vld [vmem:[%s350 + $0x58] sm:$0xff]
      %v387 = vld [vmem:[%s350 + $0x60] sm:$0xff]
      %v388 = vld [vmem:[%s350 + $0x68] sm:$0xff]
      %v389 = vld [vmem:[%s350 + $0x70] sm:$0xff]
      %v390 = vld [vmem:[%s350 + $0x78] sm:$0xff]
      %v391 = vld [vmem:[%s2] sm:$0xf]
      %v392 = vld [vmem:[%s2 + $0x4] sm:$0xf]
      %v393 = vld [vmem:[%s2 + $0x8] sm:$0xf]
      %v394 = vld [vmem:[%s2 + $0xc] sm:$0xf]
      %v395 = vld [vmem:[%s4] sm:$0x1]
      %v397 = vlaneseq
      %v398 = vshrl.u32 %v397, 7
      %v399 = vsub.s32 0, %v398
      %v400 = vrot.slane %v395, %v399
      %v418 = vunpack.c.l.b16 %v359
      %v419 = vunpack.c.l.b16 %v360
      %v420 = vunpack.c.l.b16 %v361
      %v421 = vunpack.c.l.b16 %v362
      %v422 = vunpack.c.l.b16 %v363
      %v423 = vunpack.c.l.b16 %v364
      %v424 = vunpack.c.l.b16 %v365
      %v425 = vunpack.c.l.b16 %v366
      %v426 = vunpack.c.l.b16 %v367
      %v427 = vunpack.c.l.b16 %v368
      %v428 = vunpack.c.l.b16 %v369
      %v429 = vunpack.c.l.b16 %v370
      %v430 = vunpack.c.l.b16 %v371
      %v431 = vunpack.c.l.b16 %v372
      %v432 = vunpack.c.l.b16 %v373
      %v433 = vunpack.c.l.b16 %v374
      %v434 = vpack.c.b16 %v419, %v418
      %v435 = vpack.c.b16 %v421, %v420
      %v436 = vpack.c.b16 %v423, %v422
      %v437 = vpack.c.b16 %v425, %v424
      %v438 = vpack.c.b16 %v427, %v426
      %v439 = vpack.c.b16 %v429, %v428
      %v440 = vpack.c.b16 %v431, %v430
      %v441 = vpack.c.b16 %v433, %v432
      %v446 = vunpack.c.l.b16 %v391
      %v447 = vunpack.c.l.b16 %v392
      %v448 = vunpack.c.l.b16 %v393
      %v449 = vunpack.c.l.b16 %v394
      %v450 = vpack.c.b16 %v447, %v446
      %v451 = vpack.c.b16 %v449, %v448
      %vm454 = vcmask 261120
      %v456 = vsel %vm454, %v434, 0
      %v459 = vsel %vm454, %v435, 0
      %v462 = vsel %vm454, %v436, 0
      %v465 = vsel %vm454, %v437, 0
      %v468 = vsel %vm454, %v438, 0
      %v471 = vsel %vm454, %v439, 0
      %v474 = vsel %vm454, %v440, 0
      %v477 = vsel %vm454, %v441, 0
      %479 = vmatprep.subr.bf16.mxu0 0
      %480 = vmatpush1.bf16.msra.mxu0 %v450
      %481 = vmatprep.subr.bf16.mxu0 0
      %482 = vmatpush1.bf16.msra.mxu0 %v451
      %483 = vmatprep.subr.bf16.mxu0 0
      %484 = vmatpush1.bf16.msra.mxu0 0
      %485 = vmatprep.subr.bf16.mxu0 0
      %486 = vmatpush1.bf16.msra.mxu0 0
      %487 = vmatprep.subr.bf16.mxu0 0
      %488 = vmatpush1.bf16.msra.mxu0 0
      %489 = vmatprep.subr.bf16.mxu0 0
      %490 = vmatpush1.bf16.msra.mxu0 0
      %491 = vmatprep.subr.bf16.mxu0 0
      %492 = vmatpush1.bf16.msra.mxu0 0
      %493 = vmatprep.subr.bf16.mxu0 0
      %494 = vmatpush1.bf16.msra.mxu0 0
      %495 = vmatprep.subr.bf16.mxu0 0
      %496 = vmatpush1.bf16.msra.mxu0 0
      %497 = vmatprep.subr.bf16.mxu0 0
      %498 = vmatpush1.bf16.msra.mxu0 0
      %499 = vmatprep.subr.bf16.mxu0 0
      %500 = vmatpush1.bf16.msra.mxu0 0
      %501 = vmatprep.subr.bf16.mxu0 0
      %502 = vmatpush1.bf16.msra.mxu0 0
      %503 = vmatprep.subr.bf16.mxu0 0
      %504 = vmatpush1.bf16.msra.mxu0 0
      %505 = vmatprep.subr.bf16.mxu0 0
      %506 = vmatpush1.bf16.msra.mxu0 0
      %507 = vmatprep.subr.bf16.mxu0 0
      %508 = vmatpush1.bf16.msra.mxu0 0
      %509 = vmatprep.subr.bf16.mxu0 0
      %510 = vmatpush1.bf16.msra.mxu0 0
      %511 = vmatprep.mubr.bf16.mxu0 0
      %512 = vmatmul.mubr.bf16.gmra.mrb[0].mxu0 %v456
      %v513 = vpop.f32.mrb[0].mxu0
      %v514 = vadd.f32 %v400, %v513
      %v515 = vpop.f32.mrb[0].mxu0
      %v516 = vpop.f32.mrb[0].mxu0
      %v517 = vadd.f32 %v400, %v516
      %v518 = vpop.f32.mrb[0].mxu0
      %519 = vmatprep.mubr.bf16.mxu0 0
      %520 = vmatmul.mubr.bf16.gmra.mrb[0].mxu0 %v459
      %v521 = vpop.f32.mrb[0].mxu0
      %v522 = vadd.f32 %v400, %v521
      %v523 = vpop.f32.mrb[0].mxu0
      %v524 = vpop.f32.mrb[0].mxu0
      %v525 = vadd.f32 %v400, %v524
      %v526 = vpop.f32.mrb[0].mxu0
      %527 = vmatprep.mubr.bf16.mxu0 0
      %528 = vmatmul.mubr.bf16.gmra.mrb[0].mxu0 %v462
      %v529 = vpop.f32.mrb[0].mxu0
      %v530 = vadd.f32 %v400, %v529
      %v531 = vpop.f32.mrb[0].mxu0
      %v532 = vpop.f32.mrb[0].mxu0
      %v533 = vadd.f32 %v400, %v532
      %v534 = vpop.f32.mrb[0].mxu0
      %535 = vmatprep.mubr.bf16.mxu0 0
      %536 = vmatmul.mubr.bf16.gmra.mrb[0].mxu0 %v465
      %v537 = vpop.f32.mrb[0].mxu0
      %v538 = vadd.f32 %v400, %v537
      %v539 = vpop.f32.mrb[0].mxu0
      %v540 = vpop.f32.mrb[0].mxu0
      %v541 = vadd.f32 %v400, %v540
      %v542 = vpop.f32.mrb[0].mxu0
      %543 = vmatprep.mubr.bf16.mxu0 0
      %544 = vmatmul.mubr.bf16.gmra.mrb[0].mxu0 %v468
      %v545 = vpop.f32.mrb[0].mxu0
      %v546 = vadd.f32 %v400, %v545
      %v547 = vpop.f32.mrb[0].mxu0
      %v548 = vpop.f32.mrb[0].mxu0
      %v549 = vadd.f32 %v400, %v548
      %v550 = vpop.f32.mrb[0].mxu0
      %551 = vmatprep.mubr.bf16.mxu0 0
      %552 = vmatmul.mubr.bf16.gmra.mrb[0].mxu0 %v471
      %v553 = vpop.f32.mrb[0].mxu0
      %v554 = vadd.f32 %v400, %v553
      %v555 = vpop.f32.mrb[0].mxu0
      %v556 = vpop.f32.mrb[0].mxu0
      %v557 = vadd.f32 %v400, %v556
      %v558 = vpop.f32.mrb[0].mxu0
      %559 = vmatprep.mubr.bf16.mxu0 0
      %560 = vmatmul.mubr.bf16.gmra.mrb[0].mxu0 %v474
      %v561 = vpop.f32.mrb[0].mxu0
      %v562 = vadd.f32 %v400, %v561
      %v563 = vpop.f32.mrb[0].mxu0
      %v564 = vpop.f32.mrb[0].mxu0
      %v565 = vadd.f32 %v400, %v564
      %v566 = vpop.f32.mrb[0].mxu0
      %567 = vmatprep.mubr.bf16.mxu0 0
      %568 = vmatmul.mubr.bf16.gmra.mrb[0].mxu0 %v477
      %v569 = vpop.f32.mrb[0].mxu0
      %v570 = vadd.f32 %v400, %v569
      %v571 = vpop.f32.mrb[0].mxu0
      %v572 = vpop.f32.mrb[0].mxu0
      %v573 = vadd.f32 %v400, %v572
      %v574 = vpop.f32.mrb[0].mxu0
      %575 = vdwg.mxu0
      %v576 = vld [vmem:[%s3] sm:$0xf]
      %vm577 = vcmp.eq.s32.totalorder %v375, 0
      %vm578 = vcmp.eq.s32.totalorder %v376, 0
      %vm579 = vcmp.eq.s32.totalorder %v377, 0
      %vm580 = vcmp.eq.s32.totalorder %v378, 0
      %vm581 = vcmp.eq.s32.totalorder %v379, 0
      %vm582 = vcmp.eq.s32.totalorder %v380, 0
      %vm583 = vcmp.eq.s32.totalorder %v381, 0
      %vm584 = vcmp.eq.s32.totalorder %v382, 0
      %vm585 = vcmp.eq.s32.totalorder %v383, 0
      %vm586 = vcmp.eq.s32.totalorder %v384, 0
      %vm587 = vcmp.eq.s32.totalorder %v385, 0
      %vm588 = vcmp.eq.s32.totalorder %v386, 0
      %vm589 = vcmp.eq.s32.totalorder %v387, 0
      %vm590 = vcmp.eq.s32.totalorder %v388, 0
      %vm591 = vcmp.eq.s32.totalorder %v389, 0
      %vm592 = vcmp.eq.s32.totalorder %v390, 0
      %v593 = vsel %vm577, 1, 0
      %v594 = vsel %vm578, 1, 0
      %v595 = vsel %vm579, 1, 0
      %v596 = vsel %vm580, 1, 0
      %v597 = vsel %vm581, 1, 0
      %v598 = vsel %vm582, 1, 0
      %v599 = vsel %vm583, 1, 0
      %v600 = vsel %vm584, 1, 0
      %v601 = vsel %vm585, 1, 0
      %v602 = vsel %vm586, 1, 0
      %v603 = vsel %vm587, 1, 0
      %v604 = vsel %vm588, 1, 0
      %v605 = vsel %vm589, 1, 0
      %v606 = vsel %vm590, 1, 0
      %v607 = vsel %vm591, 1, 0
      %v608 = vsel %vm592, 1, 0
      %609 = vset.pattern.permute.xlu0 0
      %610 = vperm.xlu0 %609, %v593
      %v611 = vpop.permute.xlu0 %610
      %612 = vset.pattern.permute.xlu0 0
      %613 = vperm.xlu0 %612, %v594
      %v614 = vpop.permute.xlu0 %613
      %615 = vset.pattern.permute.xlu0 0
      %616 = vperm.xlu0 %615, %v595
      %v617 = vpop.permute.xlu0 %616
      %618 = vset.pattern.permute.xlu0 0
      %619 = vperm.xlu0 %618, %v596
      %v620 = vpop.permute.xlu0 %619
      %621 = vset.pattern.permute.xlu0 0
      %622 = vperm.xlu0 %621, %v597
      %v623 = vpop.permute.xlu0 %622
      %624 = vset.pattern.permute.xlu0 0
      %625 = vperm.xlu0 %624, %v598
      %v626 = vpop.permute.xlu0 %625
      %627 = vset.pattern.permute.xlu0 0
      %628 = vperm.xlu0 %627, %v599
      %v629 = vpop.permute.xlu0 %628
      %630 = vset.pattern.permute.xlu0 0
      %631 = vperm.xlu0 %630, %v600
      %v632 = vpop.permute.xlu0 %631
      %633 = vset.pattern.permute.xlu0 0
      %634 = vperm.xlu0 %633, %v601
      %v635 = vpop.permute.xlu0 %634
      %636 = vset.pattern.permute.xlu0 0
      %637 = vperm.xlu0 %636, %v602
      %v638 = vpop.permute.xlu0 %637
      %639 = vset.pattern.permute.xlu0 0
      %640 = vperm.xlu0 %639, %v603
      %v641 = vpop.permute.xlu0 %640
      %642 = vset.pattern.permute.xlu0 0
      %643 = vperm.xlu0 %642, %v604
      %v644 = vpop.permute.xlu0 %643
      %645 = vset.pattern.permute.xlu0 0
      %646 = vperm.xlu0 %645, %v605
      %v647 = vpop.permute.xlu0 %646
      %648 = vset.pattern.permute.xlu0 0
      %649 = vperm.xlu0 %648, %v606
      %v650 = vpop.permute.xlu0 %649
      %651 = vset.pattern.permute.xlu0 0
      %652 = vperm.xlu0 %651, %v607
      %v653 = vpop.permute.xlu0 %652
      %654 = vset.pattern.permute.xlu0 0
      %655 = vperm.xlu0 %654, %v608
      %v656 = vpop.permute.xlu0 %655
      %vm657 = vcmp.eq.s32.totalorder %v611, 1
      %vm658 = vcmp.eq.s32.totalorder %v614, 1
      %vm659 = vcmp.eq.s32.totalorder %v617, 1
      %vm660 = vcmp.eq.s32.totalorder %v620, 1
      %vm661 = vcmp.eq.s32.totalorder %v623, 1
      %vm662 = vcmp.eq.s32.totalorder %v626, 1
      %vm663 = vcmp.eq.s32.totalorder %v629, 1
      %vm664 = vcmp.eq.s32.totalorder %v632, 1
      %vm665 = vcmp.eq.s32.totalorder %v635, 1
      %vm666 = vcmp.eq.s32.totalorder %v638, 1
      %vm667 = vcmp.eq.s32.totalorder %v641, 1
      %vm668 = vcmp.eq.s32.totalorder %v644, 1
      %vm669 = vcmp.eq.s32.totalorder %v647, 1
      %vm670 = vcmp.eq.s32.totalorder %v650, 1
      %vm671 = vcmp.eq.s32.totalorder %v653, 1
      %vm672 = vcmp.eq.s32.totalorder %v656, 1
      %v673 = vlaneseq
      %v674 = vshrl.u32 %v673, 7
      %v675 = vsub.s32 0, %v674
      %v676 = vrot.slane %v576, %v675
      %v677 = vsel %vm657, %v676, 0.0
      %v678 = vsel %vm658, %v676, 0.0
      %v679 = vsel %vm659, %v676, 0.0
      %v680 = vsel %vm660, %v676, 0.0
      %v681 = vsel %vm661, %v676, 0.0
      %v682 = vsel %vm662, %v676, 0.0
      %v683 = vsel %vm663, %v676, 0.0
      %v684 = vsel %vm664, %v676, 0.0
      %v685 = vsel %vm665, %v676, 0.0
      %v686 = vsel %vm666, %v676, 0.0
      %v687 = vsel %vm667, %v676, 0.0
      %v688 = vsel %vm668, %v676, 0.0
      %v689 = vsel %vm669, %v676, 0.0
      %v690 = vsel %vm670, %v676, 0.0
      %v691 = vsel %vm671, %v676, 0.0
      %v692 = vsel %vm672, %v676, 0.0
      %v693 = vadd.f32 %v514, %v677
      %v694 = vadd.f32 %v517, %v678
      %v695 = vadd.f32 %v522, %v679
      %v696 = vadd.f32 %v525, %v680
      %v697 = vadd.f32 %v530, %v681
      %v698 = vadd.f32 %v533, %v682
      %v699 = vadd.f32 %v538, %v683
      %v700 = vadd.f32 %v541, %v684
      %v701 = vadd.f32 %v546, %v685
      %v702 = vadd.f32 %v549, %v686
      %v703 = vadd.f32 %v554, %v687
      %v704 = vadd.f32 %v557, %v688
      %v705 = vadd.f32 %v562, %v689
      %v706 = vadd.f32 %v565, %v690
      %v707 = vadd.f32 %v570, %v691
      %v708 = vadd.f32 %v573, %v692
      %vm709 = vcmp.eq.s32.totalorder %v375, 1
      %vm710 = vcmp.eq.s32.totalorder %v376, 1
      %vm711 = vcmp.eq.s32.totalorder %v377, 1
      %vm712 = vcmp.eq.s32.totalorder %v378, 1
      %vm713 = vcmp.eq.s32.totalorder %v379, 1
      %vm714 = vcmp.eq.s32.totalorder %v380, 1
      %vm715 = vcmp.eq.s32.totalorder %v381, 1
      %vm716 = vcmp.eq.s32.totalorder %v382, 1
      %vm717 = vcmp.eq.s32.totalorder %v383, 1
      %vm718 = vcmp.eq.s32.totalorder %v384, 1
      %vm719 = vcmp.eq.s32.totalorder %v385, 1
      %vm720 = vcmp.eq.s32.totalorder %v386, 1
      %vm721 = vcmp.eq.s32.totalorder %v387, 1
      %vm722 = vcmp.eq.s32.totalorder %v388, 1
      %vm723 = vcmp.eq.s32.totalorder %v389, 1
      %vm724 = vcmp.eq.s32.totalorder %v390, 1
      %v725 = vsel %vm709, 1, 0
      %v726 = vsel %vm710, 1, 0
      %v727 = vsel %vm711, 1, 0
      %v728 = vsel %vm712, 1, 0
      %v729 = vsel %vm713, 1, 0
      %v730 = vsel %vm714, 1, 0
      %v731 = vsel %vm715, 1, 0
      %v732 = vsel %vm716, 1, 0
      %v733 = vsel %vm717, 1, 0
      %v734 = vsel %vm718, 1, 0
      %v735 = vsel %vm719, 1, 0
      %v736 = vsel %vm720, 1, 0
      %v737 = vsel %vm721, 1, 0
      %v738 = vsel %vm722, 1, 0
      %v739 = vsel %vm723, 1, 0
      %v740 = vsel %vm724, 1, 0
      %741 = vset.pattern.permute.xlu0 0
      %742 = vperm.xlu0 %741, %v725
      %v743 = vpop.permute.xlu0 %742
      %744 = vset.pattern.permute.xlu0 0
      %745 = vperm.xlu0 %744, %v726
      %v746 = vpop.permute.xlu0 %745
      %747 = vset.pattern.permute.xlu0 0
      %748 = vperm.xlu0 %747, %v727
      %v749 = vpop.permute.xlu0 %748
      %750 = vset.pattern.permute.xlu0 0
      %751 = vperm.xlu0 %750, %v728
      %v752 = vpop.permute.xlu0 %751
      %753 = vset.pattern.permute.xlu0 0
      %754 = vperm.xlu0 %753, %v729
      %v755 = vpop.permute.xlu0 %754
      %756 = vset.pattern.permute.xlu0 0
      %757 = vperm.xlu0 %756, %v730
      %v758 = vpop.permute.xlu0 %757
      %759 = vset.pattern.permute.xlu0 0
      %760 = vperm.xlu0 %759, %v731
      %v761 = vpop.permute.xlu0 %760
      %762 = vset.pattern.permute.xlu0 0
      %763 = vperm.xlu0 %762, %v732
      %v764 = vpop.permute.xlu0 %763
      %765 = vset.pattern.permute.xlu0 0
      %766 = vperm.xlu0 %765, %v733
      %v767 = vpop.permute.xlu0 %766
      %768 = vset.pattern.permute.xlu0 0
      %769 = vperm.xlu0 %768, %v734
      %v770 = vpop.permute.xlu0 %769
      %771 = vset.pattern.permute.xlu0 0
      %772 = vperm.xlu0 %771, %v735
      %v773 = vpop.permute.xlu0 %772
      %774 = vset.pattern.permute.xlu0 0
      %775 = vperm.xlu0 %774, %v736
      %v776 = vpop.permute.xlu0 %775
      %777 = vset.pattern.permute.xlu0 0
      %778 = vperm.xlu0 %777, %v737
      %v779 = vpop.permute.xlu0 %778
      %780 = vset.pattern.permute.xlu0 0
      %781 = vperm.xlu0 %780, %v738
      %v782 = vpop.permute.xlu0 %781
      %783 = vset.pattern.permute.xlu0 0
      %784 = vperm.xlu0 %783, %v739
      %v785 = vpop.permute.xlu0 %784
      %786 = vset.pattern.permute.xlu0 0
      %787 = vperm.xlu0 %786, %v740
      %v788 = vpop.permute.xlu0 %787
      %vm789 = vcmp.eq.s32.totalorder %v743, 1
      %vm790 = vcmp.eq.s32.totalorder %v746, 1
      %vm791 = vcmp.eq.s32.totalorder %v749, 1
      %vm792 = vcmp.eq.s32.totalorder %v752, 1
      %vm793 = vcmp.eq.s32.totalorder %v755, 1
      %vm794 = vcmp.eq.s32.totalorder %v758, 1
      %vm795 = vcmp.eq.s32.totalorder %v761, 1
      %vm796 = vcmp.eq.s32.totalorder %v764, 1
      %vm797 = vcmp.eq.s32.totalorder %v767, 1
      %vm798 = vcmp.eq.s32.totalorder %v770, 1
      %vm799 = vcmp.eq.s32.totalorder %v773, 1
      %vm800 = vcmp.eq.s32.totalorder %v776, 1
      %vm801 = vcmp.eq.s32.totalorder %v779, 1
      %vm802 = vcmp.eq.s32.totalorder %v782, 1
      %vm803 = vcmp.eq.s32.totalorder %v785, 1
      %vm804 = vcmp.eq.s32.totalorder %v788, 1
      %v805 = vlaneseq
      %v806 = vshrl.u32 %v805, 7
      %v807 = vsub.s32 1, %v806
      %v808 = vrot.slane %v576, %v807
      %v809 = vsel %vm789, %v808, 0.0
      %v810 = vsel %vm790, %v808, 0.0
      %v811 = vsel %vm791, %v808, 0.0
      %v812 = vsel %vm792, %v808, 0.0
      %v813 = vsel %vm793, %v808, 0.0
      %v814 = vsel %vm794, %v808, 0.0
      %v815 = vsel %vm795, %v808, 0.0
      %v816 = vsel %vm796, %v808, 0.0
      %v817 = vsel %vm797, %v808, 0.0
      %v818 = vsel %vm798, %v808, 0.0
      %v819 = vsel %vm799, %v808, 0.0
      %v820 = vsel %vm800, %v808, 0.0
      %v821 = vsel %vm801, %v808, 0.0
      %v822 = vsel %vm802, %v808, 0.0
      %v823 = vsel %vm803, %v808, 0.0
      %v824 = vsel %vm804, %v808, 0.0
      %v825 = vadd.f32 %v693, %v809
      %v826 = vadd.f32 %v694, %v810
      %v827 = vadd.f32 %v695, %v811
      %v828 = vadd.f32 %v696, %v812
      %v829 = vadd.f32 %v697, %v813
      %v830 = vadd.f32 %v698, %v814
      %v831 = vadd.f32 %v699, %v815
      %v832 = vadd.f32 %v700, %v816
      %v833 = vadd.f32 %v701, %v817
      %v834 = vadd.f32 %v702, %v818
      %v835 = vadd.f32 %v703, %v819
      %v836 = vadd.f32 %v704, %v820
      %v837 = vadd.f32 %v705, %v821
      %v838 = vadd.f32 %v706, %v822
      %v839 = vadd.f32 %v707, %v823
      %v840 = vadd.f32 %v708, %v824
      %vm841 = vcmp.eq.s32.totalorder %v375, 2
      %vm842 = vcmp.eq.s32.totalorder %v376, 2
      %vm843 = vcmp.eq.s32.totalorder %v377, 2
      %vm844 = vcmp.eq.s32.totalorder %v378, 2
      %vm845 = vcmp.eq.s32.totalorder %v379, 2
      %vm846 = vcmp.eq.s32.totalorder %v380, 2
      %vm847 = vcmp.eq.s32.totalorder %v381, 2
      %vm848 = vcmp.eq.s32.totalorder %v382, 2
      %vm849 = vcmp.eq.s32.totalorder %v383, 2
      %vm850 = vcmp.eq.s32.totalorder %v384, 2
      %vm851 = vcmp.eq.s32.totalorder %v385, 2
      %vm852 = vcmp.eq.s32.totalorder %v386, 2
      %vm853 = vcmp.eq.s32.totalorder %v387, 2
      %vm854 = vcmp.eq.s32.totalorder %v388, 2
      %vm855 = vcmp.eq.s32.totalorder %v389, 2
      %vm856 = vcmp.eq.s32.totalorder %v390, 2
      %v857 = vsel %vm841, 1, 0
      %v858 = vsel %vm842, 1, 0
      %v859 = vsel %vm843, 1, 0
      %v860 = vsel %vm844, 1, 0
      %v861 = vsel %vm845, 1, 0
      %v862 = vsel %vm846, 1, 0
      %v863 = vsel %vm847, 1, 0
      %v864 = vsel %vm848, 1, 0
      %v865 = vsel %vm849, 1, 0
      %v866 = vsel %vm850, 1, 0
      %v867 = vsel %vm851, 1, 0
      %v868 = vsel %vm852, 1, 0
      %v869 = vsel %vm853, 1, 0
      %v870 = vsel %vm854, 1, 0
      %v871 = vsel %vm855, 1, 0
      %v872 = vsel %vm856, 1, 0
      %873 = vset.pattern.permute.xlu0 0
      %874 = vperm.xlu0 %873, %v857
      %v875 = vpop.permute.xlu0 %874
      %876 = vset.pattern.permute.xlu0 0
      %877 = vperm.xlu0 %876, %v858
      %v878 = vpop.permute.xlu0 %877
      %879 = vset.pattern.permute.xlu0 0
      %880 = vperm.xlu0 %879, %v859
      %v881 = vpop.permute.xlu0 %880
      %882 = vset.pattern.permute.xlu0 0
      %883 = vperm.xlu0 %882, %v860
      %v884 = vpop.permute.xlu0 %883
      %885 = vset.pattern.permute.xlu0 0
      %886 = vperm.xlu0 %885, %v861
      %v887 = vpop.permute.xlu0 %886
      %888 = vset.pattern.permute.xlu0 0
      %889 = vperm.xlu0 %888, %v862
      %v890 = vpop.permute.xlu0 %889
      %891 = vset.pattern.permute.xlu0 0
      %892 = vperm.xlu0 %891, %v863
      %v893 = vpop.permute.xlu0 %892
      %894 = vset.pattern.permute.xlu0 0
      %895 = vperm.xlu0 %894, %v864
      %v896 = vpop.permute.xlu0 %895
      %897 = vset.pattern.permute.xlu0 0
      %898 = vperm.xlu0 %897, %v865
      %v899 = vpop.permute.xlu0 %898
      %900 = vset.pattern.permute.xlu0 0
      %901 = vperm.xlu0 %900, %v866
      %v902 = vpop.permute.xlu0 %901
      %903 = vset.pattern.permute.xlu0 0
      %904 = vperm.xlu0 %903, %v867
      %v905 = vpop.permute.xlu0 %904
      %906 = vset.pattern.permute.xlu0 0
      %907 = vperm.xlu0 %906, %v868
      %v908 = vpop.permute.xlu0 %907
      %909 = vset.pattern.permute.xlu0 0
      %910 = vperm.xlu0 %909, %v869
      %v911 = vpop.permute.xlu0 %910
      %912 = vset.pattern.permute.xlu0 0
      %913 = vperm.xlu0 %912, %v870
      %v914 = vpop.permute.xlu0 %913
      %915 = vset.pattern.permute.xlu0 0
      %916 = vperm.xlu0 %915, %v871
      %v917 = vpop.permute.xlu0 %916
      %918 = vset.pattern.permute.xlu0 0
      %919 = vperm.xlu0 %918, %v872
      %v920 = vpop.permute.xlu0 %919
      %vm921 = vcmp.eq.s32.totalorder %v875, 1
      %vm922 = vcmp.eq.s32.totalorder %v878, 1
      %vm923 = vcmp.eq.s32.totalorder %v881, 1
      %vm924 = vcmp.eq.s32.totalorder %v884, 1
      %vm925 = vcmp.eq.s32.totalorder %v887, 1
      %vm926 = vcmp.eq.s32.totalorder %v890, 1
      %vm927 = vcmp.eq.s32.totalorder %v893, 1
      %vm928 = vcmp.eq.s32.totalorder %v896, 1
      %vm929 = vcmp.eq.s32.totalorder %v899, 1
      %vm930 = vcmp.eq.s32.totalorder %v902, 1
      %vm931 = vcmp.eq.s32.totalorder %v905, 1
      %vm932 = vcmp.eq.s32.totalorder %v908, 1
      %vm933 = vcmp.eq.s32.totalorder %v911, 1
      %vm934 = vcmp.eq.s32.totalorder %v914, 1
      %vm935 = vcmp.eq.s32.totalorder %v917, 1
      %vm936 = vcmp.eq.s32.totalorder %v920, 1
      %v937 = vlaneseq
      %v938 = vshrl.u32 %v937, 7
      %v939 = vsub.s32 2, %v938
      %v940 = vrot.slane %v576, %v939
      %v941 = vsel %vm921, %v940, 0.0
      %v942 = vsel %vm922, %v940, 0.0
      %v943 = vsel %vm923, %v940, 0.0
      %v944 = vsel %vm924, %v940, 0.0
      %v945 = vsel %vm925, %v940, 0.0
      %v946 = vsel %vm926, %v940, 0.0
      %v947 = vsel %vm927, %v940, 0.0
      %v948 = vsel %vm928, %v940, 0.0
      %v949 = vsel %vm929, %v940, 0.0
      %v950 = vsel %vm930, %v940, 0.0
      %v951 = vsel %vm931, %v940, 0.0
      %v952 = vsel %vm932, %v940, 0.0
      %v953 = vsel %vm933, %v940, 0.0
      %v954 = vsel %vm934, %v940, 0.0
      %v955 = vsel %vm935, %v940, 0.0
      %v956 = vsel %vm936, %v940, 0.0
      %v957 = vadd.f32 %v825, %v941
      %v958 = vadd.f32 %v826, %v942
      %v959 = vadd.f32 %v827, %v943
      %v960 = vadd.f32 %v828, %v944
      %v961 = vadd.f32 %v829, %v945
      %v962 = vadd.f32 %v830, %v946
      %v963 = vadd.f32 %v831, %v947
      %v964 = vadd.f32 %v832, %v948
      %v965 = vadd.f32 %v833, %v949
      %v966 = vadd.f32 %v834, %v950
      %v967 = vadd.f32 %v835, %v951
      %v968 = vadd.f32 %v836, %v952
      %v969 = vadd.f32 %v837, %v953
      %v970 = vadd.f32 %v838, %v954
      %v971 = vadd.f32 %v839, %v955
      %v972 = vadd.f32 %v840, %v956
      %vm973 = vcmp.eq.s32.totalorder %v375, 3
      %vm974 = vcmp.eq.s32.totalorder %v376, 3
      %vm975 = vcmp.eq.s32.totalorder %v377, 3
      %vm976 = vcmp.eq.s32.totalorder %v378, 3
      %vm977 = vcmp.eq.s32.totalorder %v379, 3
      %vm978 = vcmp.eq.s32.totalorder %v380, 3
      %vm979 = vcmp.eq.s32.totalorder %v381, 3
      %vm980 = vcmp.eq.s32.totalorder %v382, 3
      %vm981 = vcmp.eq.s32.totalorder %v383, 3
      %vm982 = vcmp.eq.s32.totalorder %v384, 3
      %vm983 = vcmp.eq.s32.totalorder %v385, 3
      %vm984 = vcmp.eq.s32.totalorder %v386, 3
      %vm985 = vcmp.eq.s32.totalorder %v387, 3
      %vm986 = vcmp.eq.s32.totalorder %v388, 3
      %vm987 = vcmp.eq.s32.totalorder %v389, 3
      %vm988 = vcmp.eq.s32.totalorder %v390, 3
      %v989 = vsel %vm973, 1, 0
      %v990 = vsel %vm974, 1, 0
      %v991 = vsel %vm975, 1, 0
      %v992 = vsel %vm976, 1, 0
      %v993 = vsel %vm977, 1, 0
      %v994 = vsel %vm978, 1, 0
      %v995 = vsel %vm979, 1, 0
      %v996 = vsel %vm980, 1, 0
      %v997 = vsel %vm981, 1, 0
      %v998 = vsel %vm982, 1, 0
      %v999 = vsel %vm983, 1, 0
      %v1000 = vsel %vm984, 1, 0
      %v1001 = vsel %vm985, 1, 0
      %v1002 = vsel %vm986, 1, 0
      %v1003 = vsel %vm987, 1, 0
      %v1004 = vsel %vm988, 1, 0
      %1005 = vset.pattern.permute.xlu0 0
      %1006 = vperm.xlu0 %1005, %v989
      %v1007 = vpop.permute.xlu0 %1006
      %1008 = vset.pattern.permute.xlu0 0
      %1009 = vperm.xlu0 %1008, %v990
      %v1010 = vpop.permute.xlu0 %1009
      %1011 = vset.pattern.permute.xlu0 0
      %1012 = vperm.xlu0 %1011, %v991
      %v1013 = vpop.permute.xlu0 %1012
      %1014 = vset.pattern.permute.xlu0 0
      %1015 = vperm.xlu0 %1014, %v992
      %v1016 = vpop.permute.xlu0 %1015
      %1017 = vset.pattern.permute.xlu0 0
      %1018 = vperm.xlu0 %1017, %v993
      %v1019 = vpop.permute.xlu0 %1018
      %1020 = vset.pattern.permute.xlu0 0
      %1021 = vperm.xlu0 %1020, %v994
      %v1022 = vpop.permute.xlu0 %1021
      %1023 = vset.pattern.permute.xlu0 0
      %1024 = vperm.xlu0 %1023, %v995
      %v1025 = vpop.permute.xlu0 %1024
      %1026 = vset.pattern.permute.xlu0 0
      %1027 = vperm.xlu0 %1026, %v996
      %v1028 = vpop.permute.xlu0 %1027
      %1029 = vset.pattern.permute.xlu0 0
      %1030 = vperm.xlu0 %1029, %v997
      %v1031 = vpop.permute.xlu0 %1030
      %1032 = vset.pattern.permute.xlu0 0
      %1033 = vperm.xlu0 %1032, %v998
      %v1034 = vpop.permute.xlu0 %1033
      %1035 = vset.pattern.permute.xlu0 0
      %1036 = vperm.xlu0 %1035, %v999
      %v1037 = vpop.permute.xlu0 %1036
      %1038 = vset.pattern.permute.xlu0 0
      %1039 = vperm.xlu0 %1038, %v1000
      %v1040 = vpop.permute.xlu0 %1039
      %1041 = vset.pattern.permute.xlu0 0
      %1042 = vperm.xlu0 %1041, %v1001
      %v1043 = vpop.permute.xlu0 %1042
      %1044 = vset.pattern.permute.xlu0 0
      %1045 = vperm.xlu0 %1044, %v1002
      %v1046 = vpop.permute.xlu0 %1045
      %1047 = vset.pattern.permute.xlu0 0
      %1048 = vperm.xlu0 %1047, %v1003
      %v1049 = vpop.permute.xlu0 %1048
      %1050 = vset.pattern.permute.xlu0 0
      %1051 = vperm.xlu0 %1050, %v1004
      %v1052 = vpop.permute.xlu0 %1051
      %vm1053 = vcmp.eq.s32.totalorder %v1007, 1
      %vm1054 = vcmp.eq.s32.totalorder %v1010, 1
      %vm1055 = vcmp.eq.s32.totalorder %v1013, 1
      %vm1056 = vcmp.eq.s32.totalorder %v1016, 1
      %vm1057 = vcmp.eq.s32.totalorder %v1019, 1
      %vm1058 = vcmp.eq.s32.totalorder %v1022, 1
      %vm1059 = vcmp.eq.s32.totalorder %v1025, 1
      %vm1060 = vcmp.eq.s32.totalorder %v1028, 1
      %vm1061 = vcmp.eq.s32.totalorder %v1031, 1
      %vm1062 = vcmp.eq.s32.totalorder %v1034, 1
      %vm1063 = vcmp.eq.s32.totalorder %v1037, 1
      %vm1064 = vcmp.eq.s32.totalorder %v1040, 1
      %vm1065 = vcmp.eq.s32.totalorder %v1043, 1
      %vm1066 = vcmp.eq.s32.totalorder %v1046, 1
      %vm1067 = vcmp.eq.s32.totalorder %v1049, 1
      %vm1068 = vcmp.eq.s32.totalorder %v1052, 1
      %v1069 = vlaneseq
      %v1070 = vshrl.u32 %v1069, 7
      %v1071 = vsub.s32 3, %v1070
      %v1072 = vrot.slane %v576, %v1071
      %v1073 = vsel %vm1053, %v1072, 0.0
      %v1074 = vsel %vm1054, %v1072, 0.0
      %v1075 = vsel %vm1055, %v1072, 0.0
      %v1076 = vsel %vm1056, %v1072, 0.0
      %v1077 = vsel %vm1057, %v1072, 0.0
      %v1078 = vsel %vm1058, %v1072, 0.0
      %v1079 = vsel %vm1059, %v1072, 0.0
      %v1080 = vsel %vm1060, %v1072, 0.0
      %v1081 = vsel %vm1061, %v1072, 0.0
      %v1082 = vsel %vm1062, %v1072, 0.0
      %v1083 = vsel %vm1063, %v1072, 0.0
      %v1084 = vsel %vm1064, %v1072, 0.0
      %v1085 = vsel %vm1065, %v1072, 0.0
      %v1086 = vsel %vm1066, %v1072, 0.0
      %v1087 = vsel %vm1067, %v1072, 0.0
      %v1088 = vsel %vm1068, %v1072, 0.0
      %v1089 = vadd.f32 %v957, %v1073
      %v1090 = vadd.f32 %v958, %v1074
      %v1091 = vadd.f32 %v959, %v1075
      %v1092 = vadd.f32 %v960, %v1076
      %v1093 = vadd.f32 %v961, %v1077
      %v1094 = vadd.f32 %v962, %v1078
      %v1095 = vadd.f32 %v963, %v1079
      %v1096 = vadd.f32 %v964, %v1080
      %v1097 = vadd.f32 %v965, %v1081
      %v1098 = vadd.f32 %v966, %v1082
      %v1099 = vadd.f32 %v967, %v1083
      %v1100 = vadd.f32 %v968, %v1084
      %v1101 = vadd.f32 %v969, %v1085
      %v1102 = vadd.f32 %v970, %v1086
      %v1103 = vadd.f32 %v971, %v1087
      %v1104 = vadd.f32 %v972, %v1088
      %vm1105 = vcmask 523264
      %v1106 = vsel %vm1105, %v1089, 0.0
      %1107 = vadd.xlane.f32.xlu0 %v1106
      %v1108 = vpop.xlane.xlu0 %1107
      %v1109 = vsel %vm1105, %v1090, 0.0
      %1110 = vadd.xlane.f32.xlu0 %v1109
      %v1111 = vpop.xlane.xlu0 %1110
      %v1112 = vsel %vm1105, %v1091, 0.0
      %1113 = vadd.xlane.f32.xlu0 %v1112
      %v1114 = vpop.xlane.xlu0 %1113
      %v1115 = vsel %vm1105, %v1092, 0.0
      %1116 = vadd.xlane.f32.xlu0 %v1115
      %v1117 = vpop.xlane.xlu0 %1116
      %v1118 = vsel %vm1105, %v1093, 0.0
      %1119 = vadd.xlane.f32.xlu0 %v1118
      %v1120 = vpop.xlane.xlu0 %1119
      %v1121 = vsel %vm1105, %v1094, 0.0
      %1122 = vadd.xlane.f32.xlu0 %v1121
      %v1123 = vpop.xlane.xlu0 %1122
      %v1124 = vsel %vm1105, %v1095, 0.0
      %1125 = vadd.xlane.f32.xlu0 %v1124
      %v1126 = vpop.xlane.xlu0 %1125
      %v1127 = vsel %vm1105, %v1096, 0.0
      %1128 = vadd.xlane.f32.xlu0 %v1127
      %v1129 = vpop.xlane.xlu0 %1128
      %v1130 = vsel %vm1105, %v1097, 0.0
      %1131 = vadd.xlane.f32.xlu0 %v1130
      %v1132 = vpop.xlane.xlu0 %1131
      %v1133 = vsel %vm1105, %v1098, 0.0
      %1134 = vadd.xlane.f32.xlu0 %v1133
      %v1135 = vpop.xlane.xlu0 %1134
      %v1136 = vsel %vm1105, %v1099, 0.0
      %1137 = vadd.xlane.f32.xlu0 %v1136
      %v1138 = vpop.xlane.xlu0 %1137
      %v1139 = vsel %vm1105, %v1100, 0.0
      %1140 = vadd.xlane.f32.xlu0 %v1139
      %v1141 = vpop.xlane.xlu0 %1140
      %v1142 = vsel %vm1105, %v1101, 0.0
      %1143 = vadd.xlane.f32.xlu0 %v1142
      %v1144 = vpop.xlane.xlu0 %1143
      %v1145 = vsel %vm1105, %v1102, 0.0
      %1146 = vadd.xlane.f32.xlu0 %v1145
      %v1147 = vpop.xlane.xlu0 %1146
      %v1148 = vsel %vm1105, %v1103, 0.0
      %1149 = vadd.xlane.f32.xlu0 %v1148
      %v1150 = vpop.xlane.xlu0 %1149
      %v1151 = vsel %vm1105, %v1104, 0.0
      %1152 = vadd.xlane.f32.xlu0 %v1151
      %v1153 = vpop.xlane.xlu0 %1152
      %v1154 = vrcp.pop 64.0
      %v1155 = vmul.f32 %v1108, %v1154
      %v1156 = vmul.f32 %v1111, %v1154
      %v1157 = vmul.f32 %v1114, %v1154
      %v1158 = vmul.f32 %v1117, %v1154
      %v1159 = vmul.f32 %v1120, %v1154
      %v1160 = vmul.f32 %v1123, %v1154
      %v1161 = vmul.f32 %v1126, %v1154
      %v1162 = vmul.f32 %v1129, %v1154
      %v1163 = vmul.f32 %v1132, %v1154
      %v1164 = vmul.f32 %v1135, %v1154
      %v1165 = vmul.f32 %v1138, %v1154
      %v1166 = vmul.f32 %v1141, %v1154
      %v1167 = vmul.f32 %v1144, %v1154
      %v1168 = vmul.f32 %v1147, %v1154
      %v1169 = vmul.f32 %v1150, %v1154
      %v1170 = vmul.f32 %v1153, %v1154
      %v1171 = vmul.f32 %v1089, %v1089
      %v1172 = vmul.f32 %v1090, %v1090
      %v1173 = vmul.f32 %v1091, %v1091
      %v1174 = vmul.f32 %v1092, %v1092
      %v1175 = vmul.f32 %v1093, %v1093
      %v1176 = vmul.f32 %v1094, %v1094
      %v1177 = vmul.f32 %v1095, %v1095
      %v1178 = vmul.f32 %v1096, %v1096
      %v1179 = vmul.f32 %v1097, %v1097
      %v1180 = vmul.f32 %v1098, %v1098
      %v1181 = vmul.f32 %v1099, %v1099
      %v1182 = vmul.f32 %v1100, %v1100
      %v1183 = vmul.f32 %v1101, %v1101
      %v1184 = vmul.f32 %v1102, %v1102
      %v1185 = vmul.f32 %v1103, %v1103
      %v1186 = vmul.f32 %v1104, %v1104
      %v1187 = vsel %vm1105, %v1171, 0.0
      %1188 = vadd.xlane.f32.xlu0 %v1187
      %v1189 = vpop.xlane.xlu0 %1188
      %v1190 = vsel %vm1105, %v1172, 0.0
      %1191 = vadd.xlane.f32.xlu0 %v1190
      %v1192 = vpop.xlane.xlu0 %1191
      %v1193 = vsel %vm1105, %v1173, 0.0
      %1194 = vadd.xlane.f32.xlu0 %v1193
      %v1195 = vpop.xlane.xlu0 %1194
      %v1196 = vsel %vm1105, %v1174, 0.0
      %1197 = vadd.xlane.f32.xlu0 %v1196
      %v1198 = vpop.xlane.xlu0 %1197
      %v1199 = vsel %vm1105, %v1175, 0.0
      %1200 = vadd.xlane.f32.xlu0 %v1199
      %v1201 = vpop.xlane.xlu0 %1200
      %v1202 = vsel %vm1105, %v1176, 0.0
      %1203 = vadd.xlane.f32.xlu0 %v1202
      %v1204 = vpop.xlane.xlu0 %1203
      %v1205 = vsel %vm1105, %v1177, 0.0
      %1206 = vadd.xlane.f32.xlu0 %v1205
      %v1207 = vpop.xlane.xlu0 %1206
      %v1208 = vsel %vm1105, %v1178, 0.0
      %1209 = vadd.xlane.f32.xlu0 %v1208
      %v1210 = vpop.xlane.xlu0 %1209
      %v1211 = vsel %vm1105, %v1179, 0.0
      %1212 = vadd.xlane.f32.xlu0 %v1211
      %v1213 = vpop.xlane.xlu0 %1212
      %v1214 = vsel %vm1105, %v1180, 0.0
      %1215 = vadd.xlane.f32.xlu0 %v1214
      %v1216 = vpop.xlane.xlu0 %1215
      %v1217 = vsel %vm1105, %v1181, 0.0
      %1218 = vadd.xlane.f32.xlu0 %v1217
      %v1219 = vpop.xlane.xlu0 %1218
      %v1220 = vsel %vm1105, %v1182, 0.0
      %1221 = vadd.xlane.f32.xlu0 %v1220
      %v1222 = vpop.xlane.xlu0 %1221
      %v1223 = vsel %vm1105, %v1183, 0.0
      %1224 = vadd.xlane.f32.xlu0 %v1223
      %v1225 = vpop.xlane.xlu0 %1224
      %v1226 = vsel %vm1105, %v1184, 0.0
      %1227 = vadd.xlane.f32.xlu0 %v1226
      %v1228 = vpop.xlane.xlu0 %1227
      %v1229 = vsel %vm1105, %v1185, 0.0
      %1230 = vadd.xlane.f32.xlu0 %v1229
      %v1231 = vpop.xlane.xlu0 %1230
      %v1232 = vsel %vm1105, %v1186, 0.0
      %1233 = vadd.xlane.f32.xlu0 %v1232
      %v1234 = vpop.xlane.xlu0 %1233
      %v1235 = vmul.f32 %v1189, %v1154
      %v1236 = vmul.f32 %v1192, %v1154
      %v1237 = vmul.f32 %v1195, %v1154
      %v1238 = vmul.f32 %v1198, %v1154
      %v1239 = vmul.f32 %v1201, %v1154
      %v1240 = vmul.f32 %v1204, %v1154
      %v1241 = vmul.f32 %v1207, %v1154
      %v1242 = vmul.f32 %v1210, %v1154
      %v1243 = vmul.f32 %v1213, %v1154
      %v1244 = vmul.f32 %v1216, %v1154
      %v1245 = vmul.f32 %v1219, %v1154
      %v1246 = vmul.f32 %v1222, %v1154
      %v1247 = vmul.f32 %v1225, %v1154
      %v1248 = vmul.f32 %v1228, %v1154
      %v1249 = vmul.f32 %v1231, %v1154
      %v1250 = vmul.f32 %v1234, %v1154
      %v1251 = vmul.f32 %v1155, %v1155
      %v1252 = vmul.f32 %v1156, %v1156
      %v1253 = vmul.f32 %v1157, %v1157
      %v1254 = vmul.f32 %v1158, %v1158
      %v1255 = vmul.f32 %v1159, %v1159
      %v1256 = vmul.f32 %v1160, %v1160
      %v1257 = vmul.f32 %v1161, %v1161
      %v1258 = vmul.f32 %v1162, %v1162
      %v1259 = vmul.f32 %v1163, %v1163
      %v1260 = vmul.f32 %v1164, %v1164
      %v1261 = vmul.f32 %v1165, %v1165
      %v1262 = vmul.f32 %v1166, %v1166
      %v1263 = vmul.f32 %v1167, %v1167
      %v1264 = vmul.f32 %v1168, %v1168
      %v1265 = vmul.f32 %v1169, %v1169
      %v1266 = vmul.f32 %v1170, %v1170
      %v1267 = vsub.f32 %v1235, %v1251
      %v1268 = vsub.f32 %v1236, %v1252
      %v1269 = vsub.f32 %v1237, %v1253
      %v1270 = vsub.f32 %v1238, %v1254
      %v1271 = vsub.f32 %v1239, %v1255
      %v1272 = vsub.f32 %v1240, %v1256
      %v1273 = vsub.f32 %v1241, %v1257
      %v1274 = vsub.f32 %v1242, %v1258
      %v1275 = vsub.f32 %v1243, %v1259
      %v1276 = vsub.f32 %v1244, %v1260
      %v1277 = vsub.f32 %v1245, %v1261
      %v1278 = vsub.f32 %v1246, %v1262
      %v1279 = vsub.f32 %v1247, %v1263
      %v1280 = vsub.f32 %v1248, %v1264
      %v1281 = vsub.f32 %v1249, %v1265
      %v1282 = vsub.f32 %v1250, %v1266
      %v1283 = vmax.f32 %v1267, 0.0
      %v1284 = vmax.f32 %v1268, 0.0
      %v1285 = vmax.f32 %v1269, 0.0
      %v1286 = vmax.f32 %v1270, 0.0
      %v1287 = vmax.f32 %v1271, 0.0
      %v1288 = vmax.f32 %v1272, 0.0
      %v1289 = vmax.f32 %v1273, 0.0
      %v1290 = vmax.f32 %v1274, 0.0
      %v1291 = vmax.f32 %v1275, 0.0
      %v1292 = vmax.f32 %v1276, 0.0
      %v1293 = vmax.f32 %v1277, 0.0
      %v1294 = vmax.f32 %v1278, 0.0
      %v1295 = vmax.f32 %v1279, 0.0
      %v1296 = vmax.f32 %v1280, 0.0
      %v1297 = vmax.f32 %v1281, 0.0
      %v1298 = vmax.f32 %v1282, 0.0
      %v1299 = vsub.f32 %v1089, %v1155
      %v1300 = vsub.f32 %v1090, %v1156
      %v1301 = vsub.f32 %v1091, %v1157
      %v1302 = vsub.f32 %v1092, %v1158
      %v1303 = vsub.f32 %v1093, %v1159
      %v1304 = vsub.f32 %v1094, %v1160
      %v1305 = vsub.f32 %v1095, %v1161
      %v1306 = vsub.f32 %v1096, %v1162
      %v1307 = vsub.f32 %v1097, %v1163
      %v1308 = vsub.f32 %v1098, %v1164
      %v1309 = vsub.f32 %v1099, %v1165
      %v1310 = vsub.f32 %v1100, %v1166
      %v1311 = vsub.f32 %v1101, %v1167
      %v1312 = vsub.f32 %v1102, %v1168
      %v1313 = vsub.f32 %v1103, %v1169
      %v1314 = vsub.f32 %v1104, %v1170
      %v1315 = vadd.f32 %v1283, 1e-05
      %v1316 = vadd.f32 %v1284, 1e-05
      %v1317 = vadd.f32 %v1285, 1e-05
      %v1318 = vadd.f32 %v1286, 1e-05
      %v1319 = vadd.f32 %v1287, 1e-05
      %v1320 = vadd.f32 %v1288, 1e-05
      %v1321 = vadd.f32 %v1289, 1e-05
      %v1322 = vadd.f32 %v1290, 1e-05
      %v1323 = vadd.f32 %v1291, 1e-05
      %v1324 = vadd.f32 %v1292, 1e-05
      %v1325 = vadd.f32 %v1293, 1e-05
      %v1326 = vadd.f32 %v1294, 1e-05
      %v1327 = vadd.f32 %v1295, 1e-05
      %v1328 = vadd.f32 %v1296, 1e-05
      %v1329 = vadd.f32 %v1297, 1e-05
      %v1330 = vadd.f32 %v1298, 1e-05
      %v1331 = vrsqrt.pop %v1315
      %v1332 = vrsqrt.pop %v1316
      %v1333 = vrsqrt.pop %v1317
      %v1334 = vrsqrt.pop %v1318
      %v1335 = vrsqrt.pop %v1319
      %v1336 = vrsqrt.pop %v1320
      %v1337 = vrsqrt.pop %v1321
      %v1338 = vrsqrt.pop %v1322
      %v1339 = vrsqrt.pop %v1323
      %v1340 = vrsqrt.pop %v1324
      %v1341 = vrsqrt.pop %v1325
      %v1342 = vrsqrt.pop %v1326
      %v1343 = vrsqrt.pop %v1327
      %v1344 = vrsqrt.pop %v1328
      %v1345 = vrsqrt.pop %v1329
      %v1346 = vrsqrt.pop %v1330
      %v1347 = vmul.f32 %v1299, %v1331
      %v1348 = vmul.f32 %v1300, %v1332
      %v1349 = vmul.f32 %v1301, %v1333
      %v1350 = vmul.f32 %v1302, %v1334
      %v1351 = vmul.f32 %v1303, %v1335
      %v1352 = vmul.f32 %v1304, %v1336
      %v1353 = vmul.f32 %v1305, %v1337
      %v1354 = vmul.f32 %v1306, %v1338
      %v1355 = vmul.f32 %v1307, %v1339
      %v1356 = vmul.f32 %v1308, %v1340
      %v1357 = vmul.f32 %v1309, %v1341
      %v1358 = vmul.f32 %v1310, %v1342
      %v1359 = vmul.f32 %v1311, %v1343
      %v1360 = vmul.f32 %v1312, %v1344
      %v1361 = vmul.f32 %v1313, %v1345
      %v1362 = vmul.f32 %v1314, %v1346
      %v1363 = vmax.f32 %v1347, 0.0
      %v1364 = vmax.f32 %v1348, 0.0
      %v1365 = vmax.f32 %v1349, 0.0
      %v1366 = vmax.f32 %v1350, 0.0
      %v1367 = vmax.f32 %v1351, 0.0
      %v1368 = vmax.f32 %v1352, 0.0
      %v1369 = vmax.f32 %v1353, 0.0
      %v1370 = vmax.f32 %v1354, 0.0
      %v1371 = vmax.f32 %v1355, 0.0
      %v1372 = vmax.f32 %v1356, 0.0
      %v1373 = vmax.f32 %v1357, 0.0
      %v1374 = vmax.f32 %v1358, 0.0
      %v1375 = vmax.f32 %v1359, 0.0
      %v1376 = vmax.f32 %v1360, 0.0
      %v1377 = vmax.f32 %v1361, 0.0
      %v1378 = vmax.f32 %v1362, 0.0
      %v1379 = vpack.c.bf16 %v1364, %v1363
      %v1380 = vpack.c.bf16 %v1366, %v1365
      %v1381 = vpack.c.bf16 %v1368, %v1367
      %v1382 = vpack.c.bf16 %v1370, %v1369
      %v1383 = vpack.c.bf16 %v1372, %v1371
      %v1384 = vpack.c.bf16 %v1374, %v1373
      %v1385 = vpack.c.bf16 %v1376, %v1375
      %v1386 = vpack.c.bf16 %v1378, %v1377
      %v1387 = vld [vmem:[%s5] sm:$0xf]
      %v1388 = vld [vmem:[%s5 + $0x4] sm:$0xf]
      %v1389 = vld [vmem:[%s5 + $0x8] sm:$0xf]
      %v1390 = vld [vmem:[%s5 + $0xc] sm:$0xf]
      %v1391 = vld [vmem:[%s5 + $0x10] sm:$0xf]
      %v1392 = vld [vmem:[%s5 + $0x14] sm:$0xf]
      %v1393 = vld [vmem:[%s5 + $0x18] sm:$0xf]
      %v1394 = vld [vmem:[%s5 + $0x1c] sm:$0xf]
      %v1395 = vld [vmem:[%s6] sm:$0x1]
      %v1397 = vlaneseq
      %v1398 = vshrl.u32 %v1397, 7
      %v1399 = vsub.s32 0, %v1398
      %v1400 = vrot.slane %v1395, %v1399
      %v1410 = vunpack.c.l.b16 %v1387
      %v1411 = vunpack.c.l.b16 %v1388
      %v1412 = vunpack.c.l.b16 %v1389
      %v1413 = vunpack.c.l.b16 %v1390
      %v1414 = vunpack.c.l.b16 %v1391
      %v1415 = vunpack.c.l.b16 %v1392
      %v1416 = vunpack.c.l.b16 %v1393
      %v1417 = vunpack.c.l.b16 %v1394
      %v1418 = vpack.c.b16 %v1411, %v1410
      %v1419 = vpack.c.b16 %v1413, %v1412
      %v1420 = vpack.c.b16 %v1415, %v1414
      %v1421 = vpack.c.b16 %v1417, %v1416
      %v1427 = vsel %vm1105, %v1379, 0
      %v1430 = vsel %vm1105, %v1380, 0
      %v1433 = vsel %vm1105, %v1381, 0
      %v1436 = vsel %vm1105, %v1382, 0
      %v1439 = vsel %vm1105, %v1383, 0
      %v1442 = vsel %vm1105, %v1384, 0
      %v1445 = vsel %vm1105, %v1385, 0
      %v1448 = vsel %vm1105, %v1386, 0
      %1450 = vmatprep.subr.bf16.mxu0 0
      %1451 = vmatpush1.bf16.msra.mxu0 %v1418
      %1452 = vmatprep.subr.bf16.mxu0 0
      %1453 = vmatpush1.bf16.msra.mxu0 %v1419
      %1454 = vmatprep.subr.bf16.mxu0 0
      %1455 = vmatpush1.bf16.msra.mxu0 %v1420
      %1456 = vmatprep.subr.bf16.mxu0 0
      %1457 = vmatpush1.bf16.msra.mxu0 %v1421
      %1458 = vmatprep.subr.bf16.mxu0 0
      %1459 = vmatpush1.bf16.msra.mxu0 0
      %1460 = vmatprep.subr.bf16.mxu0 0
      %1461 = vmatpush1.bf16.msra.mxu0 0
      %1462 = vmatprep.subr.bf16.mxu0 0
      %1463 = vmatpush1.bf16.msra.mxu0 0
      %1464 = vmatprep.subr.bf16.mxu0 0
      %1465 = vmatpush1.bf16.msra.mxu0 0
      %1466 = vmatprep.subr.bf16.mxu0 0
      %1467 = vmatpush1.bf16.msra.mxu0 0
      %1468 = vmatprep.subr.bf16.mxu0 0
      %1469 = vmatpush1.bf16.msra.mxu0 0
      %1470 = vmatprep.subr.bf16.mxu0 0
      %1471 = vmatpush1.bf16.msra.mxu0 0
      %1472 = vmatprep.subr.bf16.mxu0 0
      %1473 = vmatpush1.bf16.msra.mxu0 0
      %1474 = vmatprep.subr.bf16.mxu0 0
      %1475 = vmatpush1.bf16.msra.mxu0 0
      %1476 = vmatprep.subr.bf16.mxu0 0
      %1477 = vmatpush1.bf16.msra.mxu0 0
      %1478 = vmatprep.subr.bf16.mxu0 0
      %1479 = vmatpush1.bf16.msra.mxu0 0
      %1480 = vmatprep.subr.bf16.mxu0 0
      %1481 = vmatpush1.bf16.msra.mxu0 0
      %1482 = vmatprep.mubr.bf16.mxu0 0
      %1483 = vmatmul.mubr.bf16.gmra.mrb[0].mxu0 %v1427
      %v1484 = vpop.f32.mrb[0].mxu0
      %v1485 = vadd.f32 %v1400, %v1484
      %v1486 = vpop.f32.mrb[0].mxu0
      %v1487 = vpop.f32.mrb[0].mxu0
      %v1488 = vadd.f32 %v1400, %v1487
      %v1489 = vpop.f32.mrb[0].mxu0
      %1490 = vmatprep.mubr.bf16.mxu0 0
      %1491 = vmatmul.mubr.bf16.gmra.mrb[0].mxu0 %v1430
      %v1492 = vpop.f32.mrb[0].mxu0
      %v1493 = vadd.f32 %v1400, %v1492
      %v1494 = vpop.f32.mrb[0].mxu0
      %v1495 = vpop.f32.mrb[0].mxu0
      %v1496 = vadd.f32 %v1400, %v1495
      %v1497 = vpop.f32.mrb[0].mxu0
      %1498 = vmatprep.mubr.bf16.mxu0 0
      %1499 = vmatmul.mubr.bf16.gmra.mrb[0].mxu0 %v1433
      %v1500 = vpop.f32.mrb[0].mxu0
      %v1501 = vadd.f32 %v1400, %v1500
      %v1502 = vpop.f32.mrb[0].mxu0
      %v1503 = vpop.f32.mrb[0].mxu0
      %v1504 = vadd.f32 %v1400, %v1503
      %v1505 = vpop.f32.mrb[0].mxu0
      %1506 = vmatprep.mubr.bf16.mxu0 0
      %1507 = vmatmul.mubr.bf16.gmra.mrb[0].mxu0 %v1436
      %v1508 = vpop.f32.mrb[0].mxu0
      %v1509 = vadd.f32 %v1400, %v1508
      %v1510 = vpop.f32.mrb[0].mxu0
      %v1511 = vpop.f32.mrb[0].mxu0
      %v1512 = vadd.f32 %v1400, %v1511
      %v1513 = vpop.f32.mrb[0].mxu0
      %1514 = vmatprep.mubr.bf16.mxu0 0
      %1515 = vmatmul.mubr.bf16.gmra.mrb[0].mxu0 %v1439
      %v1516 = vpop.f32.mrb[0].mxu0
      %v1517 = vadd.f32 %v1400, %v1516
      %v1518 = vpop.f32.mrb[0].mxu0
      %v1519 = vpop.f32.mrb[0].mxu0
      %v1520 = vadd.f32 %v1400, %v1519
      %v1521 = vpop.f32.mrb[0].mxu0
      %1522 = vmatprep.mubr.bf16.mxu0 0
      %1523 = vmatmul.mubr.bf16.gmra.mrb[0].mxu0 %v1442
      %v1524 = vpop.f32.mrb[0].mxu0
      %v1525 = vadd.f32 %v1400, %v1524
      %v1526 = vpop.f32.mrb[0].mxu0
      %v1527 = vpop.f32.mrb[0].mxu0
      %v1528 = vadd.f32 %v1400, %v1527
      %v1529 = vpop.f32.mrb[0].mxu0
      %1530 = vmatprep.mubr.bf16.mxu0 0
      %1531 = vmatmul.mubr.bf16.gmra.mrb[0].mxu0 %v1445
      %v1532 = vpop.f32.mrb[0].mxu0
      %v1533 = vadd.f32 %v1400, %v1532
      %v1534 = vpop.f32.mrb[0].mxu0
      %v1535 = vpop.f32.mrb[0].mxu0
      %v1536 = vadd.f32 %v1400, %v1535
      %v1537 = vpop.f32.mrb[0].mxu0
      %1538 = vmatprep.mubr.bf16.mxu0 0
      %1539 = vmatmul.mubr.bf16.gmra.mrb[0].mxu0 %v1448
      %v1540 = vpop.f32.mrb[0].mxu0
      %v1541 = vadd.f32 %v1400, %v1540
      %v1542 = vpop.f32.mrb[0].mxu0
      %v1543 = vpop.f32.mrb[0].mxu0
      %v1544 = vadd.f32 %v1400, %v1543
      %v1545 = vpop.f32.mrb[0].mxu0
      %1546 = vdwg.mxu0
      %v1547 = vsel %vm454, %v1485, 0.0
      %1548 = vadd.xlane.f32.xlu0 %v1547
      %v1549 = vpop.xlane.xlu0 %1548
      %v1550 = vsel %vm454, %v1488, 0.0
      %1551 = vadd.xlane.f32.xlu0 %v1550
      %v1552 = vpop.xlane.xlu0 %1551
      %v1553 = vsel %vm454, %v1493, 0.0
      %1554 = vadd.xlane.f32.xlu0 %v1553
      %v1555 = vpop.xlane.xlu0 %1554
      %v1556 = vsel %vm454, %v1496, 0.0
      %1557 = vadd.xlane.f32.xlu0 %v1556
      %v1558 = vpop.xlane.xlu0 %1557
      %v1559 = vsel %vm454, %v1501, 0.0
      %1560 = vadd.xlane.f32.xlu0 %v1559
      %v1561 = vpop.xlane.xlu0 %1560
      %v1562 = vsel %vm454, %v1504, 0.0
      %1563 = vadd.xlane.f32.xlu0 %v1562
      %v1564 = vpop.xlane.xlu0 %1563
      %v1565 = vsel %vm454, %v1509, 0.0
      %1566 = vadd.xlane.f32.xlu0 %v1565
      %v1567 = vpop.xlane.xlu0 %1566
      %v1568 = vsel %vm454, %v1512, 0.0
      %1569 = vadd.xlane.f32.xlu0 %v1568
      %v1570 = vpop.xlane.xlu0 %1569
      %v1571 = vsel %vm454, %v1517, 0.0
      %1572 = vadd.xlane.f32.xlu0 %v1571
      %v1573 = vpop.xlane.xlu0 %1572
      %v1574 = vsel %vm454, %v1520, 0.0
      %1575 = vadd.xlane.f32.xlu0 %v1574
      %v1576 = vpop.xlane.xlu0 %1575
      %v1577 = vsel %vm454, %v1525, 0.0
      %1578 = vadd.xlane.f32.xlu0 %v1577
      %v1579 = vpop.xlane.xlu0 %1578
      %v1580 = vsel %vm454, %v1528, 0.0
      %1581 = vadd.xlane.f32.xlu0 %v1580
      %v1582 = vpop.xlane.xlu0 %1581
      %v1583 = vsel %vm454, %v1533, 0.0
      %1584 = vadd.xlane.f32.xlu0 %v1583
      %v1585 = vpop.xlane.xlu0 %1584
      %v1586 = vsel %vm454, %v1536, 0.0
      %1587 = vadd.xlane.f32.xlu0 %v1586
      %v1588 = vpop.xlane.xlu0 %1587
      %v1589 = vsel %vm454, %v1541, 0.0
      %1590 = vadd.xlane.f32.xlu0 %v1589
      %v1591 = vpop.xlane.xlu0 %1590
      %v1592 = vsel %vm454, %v1544, 0.0
      %1593 = vadd.xlane.f32.xlu0 %v1592
      %v1594 = vpop.xlane.xlu0 %1593
      %v1595 = vrcp.pop 32.0
      %v1596 = vmul.f32 %v1549, %v1595
      %v1597 = vmul.f32 %v1552, %v1595
      %v1598 = vmul.f32 %v1555, %v1595
      %v1599 = vmul.f32 %v1558, %v1595
      %v1600 = vmul.f32 %v1561, %v1595
      %v1601 = vmul.f32 %v1564, %v1595
      %v1602 = vmul.f32 %v1567, %v1595
      %v1603 = vmul.f32 %v1570, %v1595
      %v1604 = vmul.f32 %v1573, %v1595
      %v1605 = vmul.f32 %v1576, %v1595
      %v1606 = vmul.f32 %v1579, %v1595
      %v1607 = vmul.f32 %v1582, %v1595
      %v1608 = vmul.f32 %v1585, %v1595
      %v1609 = vmul.f32 %v1588, %v1595
      %v1610 = vmul.f32 %v1591, %v1595
      %v1611 = vmul.f32 %v1594, %v1595
      %v1612 = vmul.f32 %v1485, %v1485
      %v1613 = vmul.f32 %v1488, %v1488
      %v1614 = vmul.f32 %v1493, %v1493
      %v1615 = vmul.f32 %v1496, %v1496
      %v1616 = vmul.f32 %v1501, %v1501
      %v1617 = vmul.f32 %v1504, %v1504
      %v1618 = vmul.f32 %v1509, %v1509
      %v1619 = vmul.f32 %v1512, %v1512
      %v1620 = vmul.f32 %v1517, %v1517
      %v1621 = vmul.f32 %v1520, %v1520
      %v1622 = vmul.f32 %v1525, %v1525
      %v1623 = vmul.f32 %v1528, %v1528
      %v1624 = vmul.f32 %v1533, %v1533
      %v1625 = vmul.f32 %v1536, %v1536
      %v1626 = vmul.f32 %v1541, %v1541
      %v1627 = vmul.f32 %v1544, %v1544
      %v1628 = vsel %vm454, %v1612, 0.0
      %1629 = vadd.xlane.f32.xlu0 %v1628
      %v1630 = vpop.xlane.xlu0 %1629
      %v1631 = vsel %vm454, %v1613, 0.0
      %1632 = vadd.xlane.f32.xlu0 %v1631
      %v1633 = vpop.xlane.xlu0 %1632
      %v1634 = vsel %vm454, %v1614, 0.0
      %1635 = vadd.xlane.f32.xlu0 %v1634
      %v1636 = vpop.xlane.xlu0 %1635
      %v1637 = vsel %vm454, %v1615, 0.0
      %1638 = vadd.xlane.f32.xlu0 %v1637
      %v1639 = vpop.xlane.xlu0 %1638
      %v1640 = vsel %vm454, %v1616, 0.0
      %1641 = vadd.xlane.f32.xlu0 %v1640
      %v1642 = vpop.xlane.xlu0 %1641
      %v1643 = vsel %vm454, %v1617, 0.0
      %1644 = vadd.xlane.f32.xlu0 %v1643
      %v1645 = vpop.xlane.xlu0 %1644
      %v1646 = vsel %vm454, %v1618, 0.0
      %1647 = vadd.xlane.f32.xlu0 %v1646
      %v1648 = vpop.xlane.xlu0 %1647
      %v1649 = vsel %vm454, %v1619, 0.0
      %1650 = vadd.xlane.f32.xlu0 %v1649
      %v1651 = vpop.xlane.xlu0 %1650
      %v1652 = vsel %vm454, %v1620, 0.0
      %1653 = vadd.xlane.f32.xlu0 %v1652
      %v1654 = vpop.xlane.xlu0 %1653
      %v1655 = vsel %vm454, %v1621, 0.0
      %1656 = vadd.xlane.f32.xlu0 %v1655
      %v1657 = vpop.xlane.xlu0 %1656
      %v1658 = vsel %vm454, %v1622, 0.0
      %1659 = vadd.xlane.f32.xlu0 %v1658
      %v1660 = vpop.xlane.xlu0 %1659
      %v1661 = vsel %vm454, %v1623, 0.0
      %1662 = vadd.xlane.f32.xlu0 %v1661
      %v1663 = vpop.xlane.xlu0 %1662
      %v1664 = vsel %vm454, %v1624, 0.0
      %1665 = vadd.xlane.f32.xlu0 %v1664
      %v1666 = vpop.xlane.xlu0 %1665
      %v1667 = vsel %vm454, %v1625, 0.0
      %1668 = vadd.xlane.f32.xlu0 %v1667
      %v1669 = vpop.xlane.xlu0 %1668
      %v1670 = vsel %vm454, %v1626, 0.0
      %1671 = vadd.xlane.f32.xlu0 %v1670
      %v1672 = vpop.xlane.xlu0 %1671
      %v1673 = vsel %vm454, %v1627, 0.0
      %1674 = vadd.xlane.f32.xlu0 %v1673
      %v1675 = vpop.xlane.xlu0 %1674
      %v1676 = vmul.f32 %v1630, %v1595
      %v1677 = vmul.f32 %v1633, %v1595
      %v1678 = vmul.f32 %v1636, %v1595
      %v1679 = vmul.f32 %v1639, %v1595
      %v1680 = vmul.f32 %v1642, %v1595
      %v1681 = vmul.f32 %v1645, %v1595
      %v1682 = vmul.f32 %v1648, %v1595
      %v1683 = vmul.f32 %v1651, %v1595
      %v1684 = vmul.f32 %v1654, %v1595
      %v1685 = vmul.f32 %v1657, %v1595
      %v1686 = vmul.f32 %v1660, %v1595
      %v1687 = vmul.f32 %v1663, %v1595
      %v1688 = vmul.f32 %v1666, %v1595
      %v1689 = vmul.f32 %v1669, %v1595
      %v1690 = vmul.f32 %v1672, %v1595
      %v1691 = vmul.f32 %v1675, %v1595
      %v1692 = vmul.f32 %v1596, %v1596
      %v1693 = vmul.f32 %v1597, %v1597
      %v1694 = vmul.f32 %v1598, %v1598
      %v1695 = vmul.f32 %v1599, %v1599
      %v1696 = vmul.f32 %v1600, %v1600
      %v1697 = vmul.f32 %v1601, %v1601
      %v1698 = vmul.f32 %v1602, %v1602
      %v1699 = vmul.f32 %v1603, %v1603
      %v1700 = vmul.f32 %v1604, %v1604
      %v1701 = vmul.f32 %v1605, %v1605
      %v1702 = vmul.f32 %v1606, %v1606
      %v1703 = vmul.f32 %v1607, %v1607
      %v1704 = vmul.f32 %v1608, %v1608
      %v1705 = vmul.f32 %v1609, %v1609
      %v1706 = vmul.f32 %v1610, %v1610
      %v1707 = vmul.f32 %v1611, %v1611
      %v1708 = vsub.f32 %v1676, %v1692
      %v1709 = vsub.f32 %v1677, %v1693
      %v1710 = vsub.f32 %v1678, %v1694
      %v1711 = vsub.f32 %v1679, %v1695
      %v1712 = vsub.f32 %v1680, %v1696
      %v1713 = vsub.f32 %v1681, %v1697
      %v1714 = vsub.f32 %v1682, %v1698
      %v1715 = vsub.f32 %v1683, %v1699
      %v1716 = vsub.f32 %v1684, %v1700
      %v1717 = vsub.f32 %v1685, %v1701
      %v1718 = vsub.f32 %v1686, %v1702
      %v1719 = vsub.f32 %v1687, %v1703
      %v1720 = vsub.f32 %v1688, %v1704
      %v1721 = vsub.f32 %v1689, %v1705
      %v1722 = vsub.f32 %v1690, %v1706
      %v1723 = vsub.f32 %v1691, %v1707
      %v1724 = vmax.f32 %v1708, 0.0
      %v1725 = vmax.f32 %v1709, 0.0
      %v1726 = vmax.f32 %v1710, 0.0
      %v1727 = vmax.f32 %v1711, 0.0
      %v1728 = vmax.f32 %v1712, 0.0
      %v1729 = vmax.f32 %v1713, 0.0
      %v1730 = vmax.f32 %v1714, 0.0
      %v1731 = vmax.f32 %v1715, 0.0
      %v1732 = vmax.f32 %v1716, 0.0
      %v1733 = vmax.f32 %v1717, 0.0
      %v1734 = vmax.f32 %v1718, 0.0
      %v1735 = vmax.f32 %v1719, 0.0
      %v1736 = vmax.f32 %v1720, 0.0
      %v1737 = vmax.f32 %v1721, 0.0
      %v1738 = vmax.f32 %v1722, 0.0
      %v1739 = vmax.f32 %v1723, 0.0
      %v1740 = vsub.f32 %v1485, %v1596
      %v1741 = vsub.f32 %v1488, %v1597
      %v1742 = vsub.f32 %v1493, %v1598
      %v1743 = vsub.f32 %v1496, %v1599
      %v1744 = vsub.f32 %v1501, %v1600
      %v1745 = vsub.f32 %v1504, %v1601
      %v1746 = vsub.f32 %v1509, %v1602
      %v1747 = vsub.f32 %v1512, %v1603
      %v1748 = vsub.f32 %v1517, %v1604
      %v1749 = vsub.f32 %v1520, %v1605
      %v1750 = vsub.f32 %v1525, %v1606
      %v1751 = vsub.f32 %v1528, %v1607
      %v1752 = vsub.f32 %v1533, %v1608
      %v1753 = vsub.f32 %v1536, %v1609
      %v1754 = vsub.f32 %v1541, %v1610
      %v1755 = vsub.f32 %v1544, %v1611
      %v1756 = vadd.f32 %v1724, 1e-05
      %v1757 = vadd.f32 %v1725, 1e-05
      %v1758 = vadd.f32 %v1726, 1e-05
      %v1759 = vadd.f32 %v1727, 1e-05
      %v1760 = vadd.f32 %v1728, 1e-05
      %v1761 = vadd.f32 %v1729, 1e-05
      %v1762 = vadd.f32 %v1730, 1e-05
      %v1763 = vadd.f32 %v1731, 1e-05
      %v1764 = vadd.f32 %v1732, 1e-05
      %v1765 = vadd.f32 %v1733, 1e-05
      %v1766 = vadd.f32 %v1734, 1e-05
      %v1767 = vadd.f32 %v1735, 1e-05
      %v1768 = vadd.f32 %v1736, 1e-05
      %v1769 = vadd.f32 %v1737, 1e-05
      %v1770 = vadd.f32 %v1738, 1e-05
      %v1771 = vadd.f32 %v1739, 1e-05
      %v1772 = vrsqrt.pop %v1756
      %v1773 = vrsqrt.pop %v1757
      %v1774 = vrsqrt.pop %v1758
      %v1775 = vrsqrt.pop %v1759
      %v1776 = vrsqrt.pop %v1760
      %v1777 = vrsqrt.pop %v1761
      %v1778 = vrsqrt.pop %v1762
      %v1779 = vrsqrt.pop %v1763
      %v1780 = vrsqrt.pop %v1764
      %v1781 = vrsqrt.pop %v1765
      %v1782 = vrsqrt.pop %v1766
      %v1783 = vrsqrt.pop %v1767
      %v1784 = vrsqrt.pop %v1768
      %v1785 = vrsqrt.pop %v1769
      %v1786 = vrsqrt.pop %v1770
      %v1787 = vrsqrt.pop %v1771
      %v1788 = vmul.f32 %v1740, %v1772
      %v1789 = vmul.f32 %v1741, %v1773
      %v1790 = vmul.f32 %v1742, %v1774
      %v1791 = vmul.f32 %v1743, %v1775
      %v1792 = vmul.f32 %v1744, %v1776
      %v1793 = vmul.f32 %v1745, %v1777
      %v1794 = vmul.f32 %v1746, %v1778
      %v1795 = vmul.f32 %v1747, %v1779
      %v1796 = vmul.f32 %v1748, %v1780
      %v1797 = vmul.f32 %v1749, %v1781
      %v1798 = vmul.f32 %v1750, %v1782
      %v1799 = vmul.f32 %v1751, %v1783
      %v1800 = vmul.f32 %v1752, %v1784
      %v1801 = vmul.f32 %v1753, %v1785
      %v1802 = vmul.f32 %v1754, %v1786
      %v1803 = vmul.f32 %v1755, %v1787
      %v1804 = vmax.f32 %v1788, 0.0
      %v1805 = vmax.f32 %v1789, 0.0
      %v1806 = vmax.f32 %v1790, 0.0
      %v1807 = vmax.f32 %v1791, 0.0
      %v1808 = vmax.f32 %v1792, 0.0
      %v1809 = vmax.f32 %v1793, 0.0
      %v1810 = vmax.f32 %v1794, 0.0
      %v1811 = vmax.f32 %v1795, 0.0
      %v1812 = vmax.f32 %v1796, 0.0
      %v1813 = vmax.f32 %v1797, 0.0
      %v1814 = vmax.f32 %v1798, 0.0
      %v1815 = vmax.f32 %v1799, 0.0
      %v1816 = vmax.f32 %v1800, 0.0
      %v1817 = vmax.f32 %v1801, 0.0
      %v1818 = vmax.f32 %v1802, 0.0
      %v1819 = vmax.f32 %v1803, 0.0
      %v1820 = vpack.c.bf16 %v1805, %v1804
      %v1821 = vpack.c.bf16 %v1807, %v1806
      %v1822 = vpack.c.bf16 %v1809, %v1808
      %v1823 = vpack.c.bf16 %v1811, %v1810
      %v1824 = vpack.c.bf16 %v1813, %v1812
      %v1825 = vpack.c.bf16 %v1815, %v1814
      %v1826 = vpack.c.bf16 %v1817, %v1816
      %v1827 = vpack.c.bf16 %v1819, %v1818
      %v1828 = vld [vmem:[%s7] sm:$0xf]
      %v1829 = vld [vmem:[%s7 + $0x4] sm:$0xf]
      %v1830 = vld [vmem:[%s7 + $0x8] sm:$0xf]
      %v1831 = vld [vmem:[%s7 + $0xc] sm:$0xf]
      %v1832 = vld [vmem:[%s8] sm:$0x1]
      %v1834 = vlaneseq
      %v1835 = vshrl.u32 %v1834, 7
      %v1836 = vsub.s32 0, %v1835
      %v1837 = vrot.slane %v1832, %v1836
      %v1843 = vunpack.c.l.b16 %v1828
      %v1844 = vunpack.c.l.b16 %v1829
      %v1845 = vunpack.c.l.b16 %v1830
      %v1846 = vunpack.c.l.b16 %v1831
      %v1847 = vpack.c.b16 %v1844, %v1843
      %v1848 = vpack.c.b16 %v1846, %v1845
      %v1852 = vsel %vm454, %v1820, 0
      %v1855 = vsel %vm454, %v1821, 0
      %v1858 = vsel %vm454, %v1822, 0
      %v1861 = vsel %vm454, %v1823, 0
      %v1864 = vsel %vm454, %v1824, 0
      %v1867 = vsel %vm454, %v1825, 0
      %v1870 = vsel %vm454, %v1826, 0
      %v1873 = vsel %vm454, %v1827, 0
      %1875 = vmatprep.subr.bf16.mxu0 0
      %1876 = vmatpush1.bf16.msra.mxu0 %v1847
      %1877 = vmatprep.subr.bf16.mxu0 0
      %1878 = vmatpush1.bf16.msra.mxu0 %v1848
      %1879 = vmatprep.subr.bf16.mxu0 0
      %1880 = vmatpush1.bf16.msra.mxu0 0
      %1881 = vmatprep.subr.bf16.mxu0 0
      %1882 = vmatpush1.bf16.msra.mxu0 0
      %1883 = vmatprep.subr.bf16.mxu0 0
      %1884 = vmatpush1.bf16.msra.mxu0 0
      %1885 = vmatprep.subr.bf16.mxu0 0
      %1886 = vmatpush1.bf16.msra.mxu0 0
      %1887 = vmatprep.subr.bf16.mxu0 0
      %1888 = vmatpush1.bf16.msra.mxu0 0
      %1889 = vmatprep.subr.bf16.mxu0 0
      %1890 = vmatpush1.bf16.msra.mxu0 0
      %1891 = vmatprep.subr.bf16.mxu0 0
      %1892 = vmatpush1.bf16.msra.mxu0 0
      %1893 = vmatprep.subr.bf16.mxu0 0
      %1894 = vmatpush1.bf16.msra.mxu0 0
      %1895 = vmatprep.subr.bf16.mxu0 0
      %1896 = vmatpush1.bf16.msra.mxu0 0
      %1897 = vmatprep.subr.bf16.mxu0 0
      %1898 = vmatpush1.bf16.msra.mxu0 0
      %1899 = vmatprep.subr.bf16.mxu0 0
      %1900 = vmatpush1.bf16.msra.mxu0 0
      %1901 = vmatprep.subr.bf16.mxu0 0
      %1902 = vmatpush1.bf16.msra.mxu0 0
      %1903 = vmatprep.subr.bf16.mxu0 0
      %1904 = vmatpush1.bf16.msra.mxu0 0
      %1905 = vmatprep.subr.bf16.mxu0 0
      %1906 = vmatpush1.bf16.msra.mxu0 0
      %1907 = vmatprep.mubr.bf16.mxu0 0
      %1908 = vmatmul.mubr.bf16.gmra.mrb[0].mxu0 %v1852
      %v1909 = vpop.f32.mrb[0].mxu0
      %v1910 = vadd.f32 %v1837, %v1909
      %v1911 = vpop.f32.mrb[0].mxu0
      %v1912 = vpop.f32.mrb[0].mxu0
      %v1913 = vadd.f32 %v1837, %v1912
      %v1914 = vpop.f32.mrb[0].mxu0
      %1915 = vmatprep.mubr.bf16.mxu0 0
      %1916 = vmatmul.mubr.bf16.gmra.mrb[0].mxu0 %v1855
      %v1917 = vpop.f32.mrb[0].mxu0
      %v1918 = vadd.f32 %v1837, %v1917
      %v1919 = vpop.f32.mrb[0].mxu0
      %v1920 = vpop.f32.mrb[0].mxu0
      %v1921 = vadd.f32 %v1837, %v1920
      %v1922 = vpop.f32.mrb[0].mxu0
      %1923 = vmatprep.mubr.bf16.mxu0 0
      %1924 = vmatmul.mubr.bf16.gmra.mrb[0].mxu0 %v1858
      %v1925 = vpop.f32.mrb[0].mxu0
      %v1926 = vadd.f32 %v1837, %v1925
      %v1927 = vpop.f32.mrb[0].mxu0
      %v1928 = vpop.f32.mrb[0].mxu0
      %v1929 = vadd.f32 %v1837, %v1928
      %v1930 = vpop.f32.mrb[0].mxu0
      %1931 = vmatprep.mubr.bf16.mxu0 0
      %1932 = vmatmul.mubr.bf16.gmra.mrb[0].mxu0 %v1861
      %v1933 = vpop.f32.mrb[0].mxu0
      %v1934 = vadd.f32 %v1837, %v1933
      %v1935 = vpop.f32.mrb[0].mxu0
      %v1936 = vpop.f32.mrb[0].mxu0
      %v1937 = vadd.f32 %v1837, %v1936
      %v1938 = vpop.f32.mrb[0].mxu0
      %1939 = vmatprep.mubr.bf16.mxu0 0
      %1940 = vmatmul.mubr.bf16.gmra.mrb[0].mxu0 %v1864
      %v1941 = vpop.f32.mrb[0].mxu0
      %v1942 = vadd.f32 %v1837, %v1941
      %v1943 = vpop.f32.mrb[0].mxu0
      %v1944 = vpop.f32.mrb[0].mxu0
      %v1945 = vadd.f32 %v1837, %v1944
      %v1946 = vpop.f32.mrb[0].mxu0
      %1947 = vmatprep.mubr.bf16.mxu0 0
      %1948 = vmatmul.mubr.bf16.gmra.mrb[0].mxu0 %v1867
      %v1949 = vpop.f32.mrb[0].mxu0
      %v1950 = vadd.f32 %v1837, %v1949
      %v1951 = vpop.f32.mrb[0].mxu0
      %v1952 = vpop.f32.mrb[0].mxu0
      %v1953 = vadd.f32 %v1837, %v1952
      %v1954 = vpop.f32.mrb[0].mxu0
      %1955 = vmatprep.mubr.bf16.mxu0 0
      %1956 = vmatmul.mubr.bf16.gmra.mrb[0].mxu0 %v1870
      %v1957 = vpop.f32.mrb[0].mxu0
      %v1958 = vadd.f32 %v1837, %v1957
      %v1959 = vpop.f32.mrb[0].mxu0
      %v1960 = vpop.f32.mrb[0].mxu0
      %v1961 = vadd.f32 %v1837, %v1960
      %v1962 = vpop.f32.mrb[0].mxu0
      %1963 = vmatprep.mubr.bf16.mxu0 0
      %1964 = vmatmul.mubr.bf16.gmra.mrb[0].mxu0 %v1873
      %v1965 = vpop.f32.mrb[0].mxu0
      %v1966 = vadd.f32 %v1837, %v1965
      %v1967 = vpop.f32.mrb[0].mxu0
      %v1968 = vpop.f32.mrb[0].mxu0
      %v1969 = vadd.f32 %v1837, %v1968
      %v1970 = vpop.f32.mrb[0].mxu0
      %1971 = vdwg.mxu0
      %vm1972 = vcmask 130048
      %1973 = vst.msk [vmem:[%s356] sm:$0xff] %vm1972, %v1910
      %1974 = vst.msk [vmem:[%s356 + $0x8] sm:$0xff] %vm1972, %v1913
      %1975 = vst.msk [vmem:[%s356 + $0x10] sm:$0xff] %vm1972, %v1918
      %1976 = vst.msk [vmem:[%s356 + $0x18] sm:$0xff] %vm1972, %v1921
      %1977 = vst.msk [vmem:[%s356 + $0x20] sm:$0xff] %vm1972, %v1926
      %1978 = vst.msk [vmem:[%s356 + $0x28] sm:$0xff] %vm1972, %v1929
      %1979 = vst.msk [vmem:[%s356 + $0x30] sm:$0xff] %vm1972, %v1934
      %1980 = vst.msk [vmem:[%s356 + $0x38] sm:$0xff] %vm1972, %v1937
      %1981 = vst.msk [vmem:[%s356 + $0x40] sm:$0xff] %vm1972, %v1942
      %1982 = vst.msk [vmem:[%s356 + $0x48] sm:$0xff] %vm1972, %v1945
      %1983 = vst.msk [vmem:[%s356 + $0x50] sm:$0xff] %vm1972, %v1950
      %1984 = vst.msk [vmem:[%s356 + $0x58] sm:$0xff] %vm1972, %v1953
      %1985 = vst.msk [vmem:[%s356 + $0x60] sm:$0xff] %vm1972, %v1958
      %1986 = vst.msk [vmem:[%s356 + $0x68] sm:$0xff] %vm1972, %v1961
      %1987 = vst.msk [vmem:[%s356 + $0x70] sm:$0xff] %vm1972, %v1966
      %1988 = vst.msk [vmem:[%s356 + $0x78] sm:$0xff] %vm1972, %v1969
      %s1989 = smul.u32 16, %s20
      %p1990 = scmp.lt.s32.totalorder %s1989, 31
      %s1991 = scalar_select %p1990, %s1989, 31
      %s1992 = smul.addr %s1991, 8
      %s1993 = scalar_lea.vmem %s9, %s1992
      // Predicated region
      $region57: #{tpu_custom_call.1} parent=55 // pred_check
        %p1994 = pneg %p237
      $region58: #{tpu_custom_call.1} parent=55 // pred_check_branch
        %1996 = sbr.rel (%p1994) target = $region60
      $region59: #{tpu_custom_call.1} parent=55 // pred_region
        %s1997 = smul.u32 16, %s20
      $region60: #{tpu_custom_call.1} parent=55 // pred_fallthru
        _
    $region56: #{tpu_custom_call.1} parent=5 // pred_fallthru
      _
    %p1998 = scmp.le.s32.totalorder 2, %s15
    // Predicated region
    $region61: #{tpu_custom_call.1} parent=5 // pred_check
      %p1999 = pneg %p1998
    $region62: #{tpu_custom_call.1} parent=5 // pred_check_branch
      %2001 = sbr.rel (%p1999) target = $region64
    $region63: #{tpu_custom_call.1} parent=5 // pred_region
      %s2002 = ssub.s32 %s15, 2
      // Predicated region
      $region65: #{tpu_custom_call.1} parent=63 // pred_check
        %p2003 = pneg %p243
      $region66: #{tpu_custom_call.1} parent=63 // pred_check_branch
        %2005 = sbr.rel (%p2003) target = $region68
      $region67: #{tpu_custom_call.1} parent=63 // pred_region
        %s2006 = smul.u32 16, %s21
        %p2007 = scmp.lt.s32.totalorder %s2006, 31
        %s2008 = scalar_select %p2007, %s2006, 31
        %s2009 = smul.addr %s2008, 8
        %s2010 = scalar_lea.vmem %s9, %s2009
      $region68: #{tpu_custom_call.1} parent=63 // pred_fallthru
        _
    $region64: #{tpu_custom_call.1} parent=5 // pred_fallthru
      _
  $region6: #{tpu_custom_call.1} parent=0 // loop_footer
    %s19 = sadd.s32 1, %s15
  $region7: #{tpu_custom_call.1} parent=0 // loop_footer_branch
    %14 = sbr.rel target = $region3
  $region8: #{tpu_custom_call.1} parent=0 // loop_exit
    _

</llo_original>
